<compile_context>
chip_gen: v7x
topology: tpu7x:2x2x1
jax: 0.10.0
libtpu: 0.0.40
codegen_flags: <defaults>
</compile_context>

<pallas_src>
import jax
import jax.numpy as jnp
from jax.experimental import pallas as pl
from jax.experimental.pallas import tpu as pltpu

# ---- small synthetic config (head_dim matches production InternLM2) ----
T = 8                                # sequence length (num tokens)
NUM_HEADS = 4                        # num_attention_heads
NUM_KV_HEADS = 2                     # num_key_value_heads (GQA)
HEAD_DIM = 128                       # production head_dim -> vreg-aligned heads
HIDDEN = NUM_HEADS * HEAD_DIM        # 512
HALF = HEAD_DIM // 2                 # 64
GROUP = NUM_HEADS // NUM_KV_HEADS    # 2
Q_SIZE = NUM_HEADS * HEAD_DIM        # 512
KV_SIZE = NUM_KV_HEADS * HEAD_DIM    # 256
QKV_SIZE = Q_SIZE + 2 * KV_SIZE      # 1024
ROPE_THETA = 10000.0
SCALE = HEAD_DIM ** -0.5


def attention_kernel(x_ref, wqkv_ref, wo_ref, cos_ref, sin_ref, out_ref):
    t = x_ref.shape[0]

    # --- fused QKV projection: bf16 operands, f32 MXU accumulation ---
    qkv = jnp.dot(x_ref[...], wqkv_ref[...],
                  preferred_element_type=jnp.float32)             # (T, QKV_SIZE) f32

    # --- neox RoPE per head: one XLU lane-roll by HALF swaps the halves ---
    #   out_lo = x1*cos - x2*sin ; out_hi = x2*cos + x1*sin
    #   == x * [cos|cos] + roll(x, HALF, lanes) * [-sin|sin]
    cos = cos_ref[...]                                            # (T, HEAD_DIM) f32
    sin = sin_ref[...]                                            # (T, HEAD_DIM) f32

    def rope(xh):                                                 # (T, HEAD_DIM)
        return xh * cos + pltpu.roll(xh, HALF, axis=1) * sin

    # --- head split: every slice is a 128-lane (vreg) aligned lane block ---
    q_heads = [rope(qkv[:, h * HEAD_DIM:(h + 1) * HEAD_DIM])
               for h in range(NUM_HEADS)]
    k_heads = [rope(qkv[:, Q_SIZE + g * HEAD_DIM:Q_SIZE + (g + 1) * HEAD_DIM])
               for g in range(NUM_KV_HEADS)]
    v_heads = [qkv[:, Q_SIZE + KV_SIZE + g * HEAD_DIM:
                      Q_SIZE + KV_SIZE + (g + 1) * HEAD_DIM]
               for g in range(NUM_KV_HEADS)]

    # batched (H, T, d); GQA broadcast of KV heads is a batch-axis copy only.
    q3 = jnp.stack(q_heads, axis=0)
    k3 = jnp.stack([k_heads[h // GROUP] for h in range(NUM_HEADS)], axis=0)
    v3 = jnp.stack([v_heads[h // GROUP] for h in range(NUM_HEADS)], axis=0)

    # --- batched causal attention (SCALE pre-folded into Wq at load time) ---
    s = jnp.einsum('htd,hsd->hts',
                   q3.astype(jnp.bfloat16), k3.astype(jnp.bfloat16),
                   preferred_element_type=jnp.float32)            # (H, T, T) f32

    # in-kernel causal mask: 2-D iota compare, no (T,T) bias DMA.
    row = jax.lax.broadcasted_iota(jnp.int32, (t, t), 0)
    col = jax.lax.broadcasted_iota(jnp.int32, (t, t), 1)
    s = jnp.where((col <= row)[None, :, :], s, -1e30)

    # softmax in f32; normalize AFTER the AV matmul (scales (H,T,d), not (H,T,S)).
    m = jnp.max(s, axis=-1, keepdims=True)
    p = jnp.exp(s - m)
    denom = jnp.sum(p, axis=-1, keepdims=True)
    o3 = jnp.einsum('hts,hsd->htd',
                    p.astype(jnp.bfloat16), v3.astype(jnp.bfloat16),
                    preferred_element_type=jnp.float32)           # (H, T, d) f32
    o3 = o3 * pl.reciprocal(denom, approx=True)                   # EUP reciprocal

    # --- output projection: lane-dense (HIDDEN % 128 == 0) unmasked store ---
    o_cat = jnp.concatenate([o3[h] for h in range(NUM_HEADS)], axis=1)  # (T, Q_SIZE)
    out_ref[...] = jnp.dot(o_cat.astype(jnp.bfloat16), wo_ref[...],
                           preferred_element_type=jnp.float32)


def prepare_weights(wqkv, wo):
    """One-time prep at weight-load time (NOT in the per-call hot path):
    fold the attention scale into the Q columns (RoPE is a rotation, so scaling
    commutes) and cast both projection weights to bf16 for native MXU peak."""
    wqkv = wqkv.astype(jnp.float32).at[:, :Q_SIZE].multiply(SCALE)
    return wqkv.astype(jnp.bfloat16), wo.astype(jnp.bfloat16)


def build_rope_tables(positions):
    """neox cos / signed-sin tables, (T, HEAD_DIM) each, f32.
    TODO(synk): in production precompute for max_position_embeddings at load
    time and gather rows by position instead of recomputing trig per call."""
    inv_freq = 1.0 / (ROPE_THETA ** (
        jnp.arange(0, HEAD_DIM, 2, dtype=jnp.float32) / HEAD_DIM))
    freqs = positions.astype(jnp.float32)[:, None] * inv_freq[None, :]  # (T, HALF)
    cos = jnp.cos(freqs)
    sin = jnp.sin(freqs)
    cos_t = jnp.concatenate([cos, cos], axis=1)       # (T, HEAD_DIM)
    sin_t = jnp.concatenate([-sin, sin], axis=1)      # (T, HEAD_DIM), signed
    return cos_t, sin_t


def internlm2_attention(hidden_states, wqkv_bf16, wo_bf16, cos_t, sin_t):
    """Matches InternLM2Attention.forward (prefill, causal, no kv cache)."""
    t = hidden_states.shape[0]
    inputs = (hidden_states.astype(jnp.bfloat16), wqkv_bf16, wo_bf16, cos_t, sin_t)
    return pl.pallas_call(
        attention_kernel,
        out_shape=jax.ShapeDtypeStruct((t, HIDDEN), jnp.float32),
        in_specs=[pl.BlockSpec(memory_space=pltpu.MemorySpace.VMEM)
                  for _ in inputs],
        out_specs=pl.BlockSpec(memory_space=pltpu.MemorySpace.VMEM),
    )(*inputs)


# ---------------- pure-JAX reference (f32, HIGHEST precision) ----------------
def _rope_ref(x, cos, sin):
    x1, x2 = x[:, :HALF], x[:, HALF:]
    return jnp.concatenate([x1 * cos - x2 * sin, x2 * cos + x1 * sin], axis=-1)


def reference(positions, hidden_states, wqkv, wo):
    hp = jax.lax.Precision.HIGHEST
    inv_freq = 1.0 / (ROPE_THETA ** (
        jnp.arange(0, HEAD_DIM, 2, dtype=jnp.float32) / HEAD_DIM))
    freqs = positions.astype(jnp.float32)[:, None] * inv_freq[None, :]
    cos, sin = jnp.cos(freqs), jnp.sin(freqs)

    qkv = jnp.dot(hidden_states, wqkv, precision=hp)
    q, k, v = jnp.split(qkv, [Q_SIZE, Q_SIZE + KV_SIZE], axis=1)
    t = hidden_states.shape[0]
    causal = jnp.arange(t)[None, :] <= jnp.arange(t)[:, None]

    outs = []
    for qh in range(NUM_HEADS):
        kvh = qh // GROUP
        q_h = _rope_ref(q[:, qh * HEAD_DIM:(qh + 1) * HEAD_DIM], cos, sin)
        k_h = _rope_ref(k[:, kvh * HEAD_DIM:(kvh + 1) * HEAD_DIM], cos, sin)
        v_h = v[:, kvh * HEAD_DIM:(kvh + 1) * HEAD_DIM]
        s = jnp.dot(q_h, k_h.T, precision=hp) * SCALE
        s = jnp.where(causal, s, -jnp.inf)
        p = jax.nn.softmax(s, axis=-1)
        outs.append(jnp.dot(p, v_h, precision=hp))
    attn = jnp.concatenate(outs, axis=1)
    return jnp.dot(attn, wo, precision=hp)


if __name__ == "__main__":
    key = jax.random.PRNGKey(0)
    k1, k2, k3 = jax.random.split(key, 3)
    wqkv = (HIDDEN ** -0.5) * jax.random.normal(k1, (HIDDEN, QKV_SIZE),
                                                dtype=jnp.float32)
    wo = (Q_SIZE ** -0.5) * jax.random.normal(k2, (Q_SIZE, HIDDEN),
                                              dtype=jnp.float32)
    hidden_states = jax.random.normal(k3, (T, HIDDEN), dtype=jnp.float32)
    positions = jnp.arange(T, dtype=jnp.int32)

    # One-time prep (weight-load time), hoisted out of the per-call hot path.
    wqkv_bf16, wo_bf16 = prepare_weights(wqkv, wo)
    cos_t, sin_t = build_rope_tables(positions)

    out = internlm2_attention(hidden_states, wqkv_bf16, wo_bf16, cos_t, sin_t)
    jax.block_until_ready(out)

    ref = reference(positions, hidden_states, wqkv, wo)
    assert out.shape == (T, HIDDEN)
    max_err = float(jnp.max(jnp.abs(out - ref)))
    # Tolerance covers bf16 MXU operands + approx EUP reciprocal vs the
    # f32-HIGHEST reference; real bugs (mask/RoPE/head mapping) give O(1) error.
    assert bool(jnp.allclose(out, ref, rtol=5e-2, atol=5e-2)), max_err
    print("KERNEL_OK")
</pallas_src>

<mosaic_0001>
module attributes {stable_mosaic.version = 11 : i64} {
  func.func @attention_kernel(%arg0: memref<8x512xbf16, #tpu.memory_space<vmem>>, %arg1: memref<512x1024xbf16, #tpu.memory_space<vmem>>, %arg2: memref<512x512xbf16, #tpu.memory_space<vmem>>, %arg3: memref<8x128xf32, #tpu.memory_space<vmem>>, %arg4: memref<8x128xf32, #tpu.memory_space<vmem>>, %arg5: memref<8x512xf32, #tpu.memory_space<vmem>>) attributes {dimension_semantics = [], scalar_prefetch = 0 : i64, scratch_operands = 0 : i64, tpu.core_type = #tpu.core_type<tc>} {
    %c0 = arith.constant 0 : index
    %c0_0 = arith.constant 0 : index
    %0 = vector.load %arg0[%c0, %c0_0] : memref<8x512xbf16, #tpu.memory_space<vmem>>, vector<8x512xbf16>
    %c0_1 = arith.constant 0 : index
    %c0_2 = arith.constant 0 : index
    %1 = vector.load %arg1[%c0_1, %c0_2] : memref<512x1024xbf16, #tpu.memory_space<vmem>>, vector<512x1024xbf16>
    %cst = arith.constant dense<0.000000e+00> : vector<8x1024xf32>
    %2 = tpu.matmul %0, %1, %cst {dimension_numbers = #tpu.dot_dimension_numbers<[1], [0], [0], [1], [0, 0, 1, 1], [], []>} : vector<8x512xbf16>, vector<512x1024xbf16>, vector<8x1024xf32> -> vector<8x1024xf32>
    %c0_3 = arith.constant 0 : index
    %c0_4 = arith.constant 0 : index
    %3 = vector.load %arg3[%c0_3, %c0_4] : memref<8x128xf32, #tpu.memory_space<vmem>>, vector<8x128xf32>
    %c0_5 = arith.constant 0 : index
    %c0_6 = arith.constant 0 : index
    %4 = vector.load %arg4[%c0_5, %c0_6] : memref<8x128xf32, #tpu.memory_space<vmem>>, vector<8x128xf32>
    %5 = vector.extract_strided_slice %2 {offsets = [0, 0], sizes = [8, 128], strides = [1, 1]} : vector<8x1024xf32> to vector<8x128xf32>
    %6 = arith.mulf %5, %3 : vector<8x128xf32>
    %c64_i32 = arith.constant 64 : i32
    %7 = tpu.dynamic_rotate %5 by %c64_i32 dim 1 : vector<8x128xf32>, i32 -> vector<8x128xf32>
    %8 = arith.mulf %7, %4 : vector<8x128xf32>
    %9 = arith.addf %6, %8 : vector<8x128xf32>
    %10 = vector.extract_strided_slice %2 {offsets = [0, 128], sizes = [8, 128], strides = [1, 1]} : vector<8x1024xf32> to vector<8x128xf32>
    %11 = arith.mulf %10, %3 : vector<8x128xf32>
    %c64_i32_7 = arith.constant 64 : i32
    %12 = tpu.dynamic_rotate %10 by %c64_i32_7 dim 1 : vector<8x128xf32>, i32 -> vector<8x128xf32>
    %13 = arith.mulf %12, %4 : vector<8x128xf32>
    %14 = arith.addf %11, %13 : vector<8x128xf32>
    %15 = vector.extract_strided_slice %2 {offsets = [0, 256], sizes = [8, 128], strides = [1, 1]} : vector<8x1024xf32> to vector<8x128xf32>
    %16 = arith.mulf %15, %3 : vector<8x128xf32>
    %c64_i32_8 = arith.constant 64 : i32
    %17 = tpu.dynamic_rotate %15 by %c64_i32_8 dim 1 : vector<8x128xf32>, i32 -> vector<8x128xf32>
    %18 = arith.mulf %17, %4 : vector<8x128xf32>
    %19 = arith.addf %16, %18 : vector<8x128xf32>
    %20 = vector.extract_strided_slice %2 {offsets = [0, 384], sizes = [8, 128], strides = [1, 1]} : vector<8x1024xf32> to vector<8x128xf32>
    %21 = arith.mulf %20, %3 : vector<8x128xf32>
    %c64_i32_9 = arith.constant 64 : i32
    %22 = tpu.dynamic_rotate %20 by %c64_i32_9 dim 1 : vector<8x128xf32>, i32 -> vector<8x128xf32>
    %23 = arith.mulf %22, %4 : vector<8x128xf32>
    %24 = arith.addf %21, %23 : vector<8x128xf32>
    %25 = vector.extract_strided_slice %2 {offsets = [0, 512], sizes = [8, 128], strides = [1, 1]} : vector<8x1024xf32> to vector<8x128xf32>
    %26 = arith.mulf %25, %3 : vector<8x128xf32>
    %c64_i32_10 = arith.constant 64 : i32
    %27 = tpu.dynamic_rotate %25 by %c64_i32_10 dim 1 : vector<8x128xf32>, i32 -> vector<8x128xf32>
    %28 = arith.mulf %27, %4 : vector<8x128xf32>
    %29 = arith.addf %26, %28 : vector<8x128xf32>
    %30 = vector.extract_strided_slice %2 {offsets = [0, 640], sizes = [8, 128], strides = [1, 1]} : vector<8x1024xf32> to vector<8x128xf32>
    %31 = arith.mulf %30, %3 : vector<8x128xf32>
    %c64_i32_11 = arith.constant 64 : i32
    %32 = tpu.dynamic_rotate %30 by %c64_i32_11 dim 1 : vector<8x128xf32>, i32 -> vector<8x128xf32>
    %33 = arith.mulf %32, %4 : vector<8x128xf32>
    %34 = arith.addf %31, %33 : vector<8x128xf32>
    %35 = vector.extract_strided_slice %2 {offsets = [0, 768], sizes = [8, 128], strides = [1, 1]} : vector<8x1024xf32> to vector<8x128xf32>
    %36 = vector.extract_strided_slice %2 {offsets = [0, 896], sizes = [8, 128], strides = [1, 1]} : vector<8x1024xf32> to vector<8x128xf32>
    %37 = vector.shape_cast %9 : vector<8x128xf32> to vector<1x8x128xf32>
    %38 = vector.shape_cast %14 : vector<8x128xf32> to vector<1x8x128xf32>
    %39 = vector.shape_cast %19 : vector<8x128xf32> to vector<1x8x128xf32>
    %40 = vector.shape_cast %24 : vector<8x128xf32> to vector<1x8x128xf32>
    %41 = tpu.concatenate %37, %38, %39, %40 in 0 : vector<1x8x128xf32>, vector<1x8x128xf32>, vector<1x8x128xf32>, vector<1x8x128xf32> -> vector<4x8x128xf32>
    %42 = vector.shape_cast %29 : vector<8x128xf32> to vector<1x8x128xf32>
    %43 = vector.shape_cast %29 : vector<8x128xf32> to vector<1x8x128xf32>
    %44 = vector.shape_cast %34 : vector<8x128xf32> to vector<1x8x128xf32>
    %45 = vector.shape_cast %34 : vector<8x128xf32> to vector<1x8x128xf32>
    %46 = tpu.concatenate %42, %43, %44, %45 in 0 : vector<1x8x128xf32>, vector<1x8x128xf32>, vector<1x8x128xf32>, vector<1x8x128xf32> -> vector<4x8x128xf32>
    %47 = vector.shape_cast %35 : vector<8x128xf32> to vector<1x8x128xf32>
    %48 = vector.shape_cast %35 : vector<8x128xf32> to vector<1x8x128xf32>
    %49 = vector.shape_cast %36 : vector<8x128xf32> to vector<1x8x128xf32>
    %50 = vector.shape_cast %36 : vector<8x128xf32> to vector<1x8x128xf32>
    %51 = tpu.concatenate %47, %48, %49, %50 in 0 : vector<1x8x128xf32>, vector<1x8x128xf32>, vector<1x8x128xf32>, vector<1x8x128xf32> -> vector<4x8x128xf32>
    %52 = arith.truncf %41 : vector<4x8x128xf32> to vector<4x8x128xbf16>
    %53 = arith.truncf %46 : vector<4x8x128xf32> to vector<4x8x128xbf16>
    "tpu.trace_start"() <{level = 10 : i32, message = "htd,hsd->hts"}> : () -> ()
    %cst_12 = arith.constant dense<0.000000e+00> : vector<4x8x8xf32>
    %54 = tpu.matmul %52, %53, %cst_12 {dimension_numbers = #tpu.dot_dimension_numbers<[2], [2], [1], [1], [0, 0, 0, 1, 1, 1], [0], [0]>} : vector<4x8x128xbf16>, vector<4x8x128xbf16>, vector<4x8x8xf32> -> vector<4x8x8xf32>
    "tpu.trace_stop"() : () -> ()
    %55 = tpu.iota {dimensions = array<i32: 0>} : vector<8x8xi32>
    %56 = tpu.iota {dimensions = array<i32: 1>} : vector<8x8xi32>
    %57 = arith.cmpi sle, %56, %55 : vector<8x8xi32>
    %58 = vector.shape_cast %57 : vector<8x8xi1> to vector<1x8x8xi1>
    %cst_13 = arith.constant -1.000000e+30 : f32
    %59 = vector.shape_cast %58 : vector<1x8x8xi1> to vector<1x8x8xi1>
    %60 = vector.broadcast %59 : vector<1x8x8xi1> to vector<4x8x8xi1>
    %61 = vector.broadcast %cst_13 : f32 to vector<4x8x8xf32>
    %62 = arith.select %60, %54, %61 : vector<4x8x8xi1>, vector<4x8x8xf32>
    %cst_14 = arith.constant dense<0xFF800000> : vector<4x8xf32>
    %63 = vector.multi_reduction <maximumf>, %62, %cst_14 [2] : vector<4x8x8xf32> to vector<4x8xf32>
    %64 = vector.shape_cast %63 : vector<4x8xf32> to vector<4x8x1xf32>
    %65 = vector.broadcast %64 : vector<4x8x1xf32> to vector<4x8x8xf32>
    %66 = arith.subf %62, %65 : vector<4x8x8xf32>
    %67 = math.exp %66 : vector<4x8x8xf32>
    %cst_15 = arith.constant dense<0.000000e+00> : vector<4x8xf32>
    %68 = vector.multi_reduction <add>, %67, %cst_15 [2] : vector<4x8x8xf32> to vector<4x8xf32>
    %69 = vector.shape_cast %68 : vector<4x8xf32> to vector<4x8x1xf32>
    %70 = arith.truncf %67 : vector<4x8x8xf32> to vector<4x8x8xbf16>
    %71 = arith.truncf %51 : vector<4x8x128xf32> to vector<4x8x128xbf16>
    "tpu.trace_start"() <{level = 10 : i32, message = "hts,hsd->htd"}> : () -> ()
    %cst_16 = arith.constant dense<0.000000e+00> : vector<4x8x128xf32>
    %72 = tpu.matmul %70, %71, %cst_16 {dimension_numbers = #tpu.dot_dimension_numbers<[2], [1], [1], [2], [0, 0, 0, 1, 1, 2], [0], [0]>} : vector<4x8x8xbf16>, vector<4x8x128xbf16>, vector<4x8x128xf32> -> vector<4x8x128xf32>
    "tpu.trace_stop"() : () -> ()
    %73 = tpu.reciprocal %69 {approx = true} : vector<4x8x1xf32> -> vector<4x8x1xf32>
    %74 = vector.broadcast %73 : vector<4x8x1xf32> to vector<4x8x128xf32>
    %75 = arith.mulf %72, %74 : vector<4x8x128xf32>
    %76 = vector.extract_strided_slice %75 {offsets = [0, 0, 0], sizes = [1, 8, 128], strides = [1, 1, 1]} : vector<4x8x128xf32> to vector<1x8x128xf32>
    %77 = vector.shape_cast %76 : vector<1x8x128xf32> to vector<8x128xf32>
    %78 = vector.extract_strided_slice %75 {offsets = [1, 0, 0], sizes = [1, 8, 128], strides = [1, 1, 1]} : vector<4x8x128xf32> to vector<1x8x128xf32>
    %79 = vector.shape_cast %78 : vector<1x8x128xf32> to vector<8x128xf32>
    %80 = vector.extract_strided_slice %75 {offsets = [2, 0, 0], sizes = [1, 8, 128], strides = [1, 1, 1]} : vector<4x8x128xf32> to vector<1x8x128xf32>
    %81 = vector.shape_cast %80 : vector<1x8x128xf32> to vector<8x128xf32>
    %82 = vector.extract_strided_slice %75 {offsets = [3, 0, 0], sizes = [1, 8, 128], strides = [1, 1, 1]} : vector<4x8x128xf32> to vector<1x8x128xf32>
    %83 = vector.shape_cast %82 : vector<1x8x128xf32> to vector<8x128xf32>
    %84 = tpu.concatenate %77, %79, %81, %83 in 1 : vector<8x128xf32>, vector<8x128xf32>, vector<8x128xf32>, vector<8x128xf32> -> vector<8x512xf32>
    %85 = arith.truncf %84 : vector<8x512xf32> to vector<8x512xbf16>
    %c0_17 = arith.constant 0 : index
    %c0_18 = arith.constant 0 : index
    %86 = vector.load %arg2[%c0_17, %c0_18] : memref<512x512xbf16, #tpu.memory_space<vmem>>, vector<512x512xbf16>
    %cst_19 = arith.constant dense<0.000000e+00> : vector<8x512xf32>
    %87 = tpu.matmul %85, %86, %cst_19 {dimension_numbers = #tpu.dot_dimension_numbers<[1], [0], [0], [1], [0, 0, 1, 1], [], []>} : vector<8x512xbf16>, vector<512x512xbf16>, vector<8x512xf32> -> vector<8x512xf32>
    %c0_20 = arith.constant 0 : index
    %c0_21 = arith.constant 0 : index
    %88 = vector.load %arg5[%c0_20, %c0_21] : memref<8x512xf32, #tpu.memory_space<vmem>>, vector<8x512xf32>
    tpu.vector_store %arg5[%c0_20, %c0_21], %87 {strides = array<i32>} : memref<8x512xf32, #tpu.memory_space<vmem>>, vector<8x512xf32>,
    return
  }
}

</mosaic_0001>

<llo_original>
// kernel: tpu_custom_call.1
$region0: #{tpu_custom_call.1}
  #allocation0 [shape = 'u32[]', space=smem, size = 0x4, offset = 0x4, fixed_abs, tag = 'smem constant byte address 0x4 - core index']
  #allocation1 [shape = 'u32[144,128]{1,0:T(1,128)}', space=vmem, size = 0x12000, scoped, tag = 'internal scratch']
  %s0 = inlined_call_operand.hbm [shape: bf16[8,512], index: 0, kind: input, shape index: {}]
  %s1 = inlined_call_operand.hbm [shape: bf16[512,1024], index: 1, kind: input, shape index: {}]
  %s2 = inlined_call_operand.hbm [shape: bf16[512,512], index: 2, kind: input, shape index: {}]
  %s3 = inlined_call_operand.vmem [shape: f32[8,128], index: 3, kind: input, shape index: {}]
  %s4 = inlined_call_operand.hbm [shape: f32[8,128], index: 4, kind: input, shape index: {}]
  %s5 = inlined_call_operand.hbm [shape: f32[8,512], index: 5, kind: output, shape index: {}]
  %s6 = sld [smem:[#allocation0]]
  $region46: #{tpu_custom_call.1} parent=0
    _
  %s8 = ssub.s32 1, %s6
  %s9 = scalar_select 0, %s8, %s6
  $region1: #{tpu_custom_call.1} parent=0
    #allocation2 [shape = 'u8[8192]{0}', space=vmem, size = 0x2000, scoped, tag = 'input window, operand 0, single buffered']
    #allocation3 [shape = 's32[1]{0}', space=sflag, size = 0x4, scoped, tag = 'scoped memory for tpu_custom_call.1']
    #allocation4 [shape = 's32[1]{0}', space=sflag, size = 0x4, scoped, tag = 'scoped memory for tpu_custom_call.1']
    #allocation5 [shape = 'u8[1048576]{0}', space=vmem, size = 0x100000, scoped, tag = 'input window, operand 1, single buffered']
    #allocation6 [shape = 's32[1]{0}', space=sflag, size = 0x4, scoped, tag = 'scoped memory for tpu_custom_call.1']
    #allocation7 [shape = 'u8[524288]{0}', space=vmem, size = 0x80000, scoped, tag = 'input window, operand 2, single buffered']
    #allocation8 [shape = 'u8[4096]{0}', space=vmem, size = 0x1000, scoped, tag = 'input window, operand 4, single buffered']
    #allocation9 [shape = 's32[1]{0}', space=sflag, size = 0x4, scoped, tag = 'scoped memory for tpu_custom_call.1']
    #allocation10 [shape = 'u8[16384]{0}', space=vmem, size = 0x4000, scoped, tag = 'output window, operand 0, single buffered']
    %10 = vsyncpa [#allocation3], 0
    %11 = vsyncpa [#allocation6], 0
    %12 = vsyncpa [#allocation9], 0
    %13 = vsyncpa [#allocation4], 0
    // Predicated region
    $region2: #{tpu_custom_call.1} parent=1 // pred_check
      _
    $region3: #{tpu_custom_call.1} parent=1 // pred_check_branch
      %15 = sbr.rel (0) target = $region5
    $region4: #{tpu_custom_call.1} parent=1 // pred_region
      %s17 = ssub.s32 256, 256
      %18 = vsyncadd [#allocation3], %s17
      %s20 = sshll.u32 [#allocation2], 4
      %s21 = int_to_ptr.vmem [resolvable:$true] %s20
      %23 = dma.hbm_to_vmem [thread:$0]  %s0, 256, %s21, [#allocation3]
    $region5: #{tpu_custom_call.1} parent=1 // pred_fallthru
      _
    // Predicated region
    $region6: #{tpu_custom_call.1} parent=1 // pred_check
      _
    $region7: #{tpu_custom_call.1} parent=1 // pred_check_branch
      %25 = sbr.rel (0) target = $region9
    $region8: #{tpu_custom_call.1} parent=1 // pred_region
      %s27 = ssub.s32 32768, 32768
      %28 = vsyncadd [#allocation6], %s27
      %s29 = sshll.u32 [#allocation5], 4
      %s30 = int_to_ptr.vmem [resolvable:$true] %s29
      %35 = dma.hbm_to_vmem [thread:$0]  %s1, 32768, %s30, [#allocation6], 512, 512, 32
    $region9: #{tpu_custom_call.1} parent=1 // pred_fallthru
      _
    // Predicated region
    $region10: #{tpu_custom_call.1} parent=1 // pred_check
      _
    $region11: #{tpu_custom_call.1} parent=1 // pred_check_branch
      %37 = sbr.rel (0) target = $region13
    $region12: #{tpu_custom_call.1} parent=1 // pred_region
      %s39 = ssub.s32 16384, 16384
      %40 = vsyncadd [#allocation6], %s39
      %s41 = sshll.u32 [#allocation7], 4
      %s42 = int_to_ptr.vmem [resolvable:$true] %s41
      %47 = dma.hbm_to_vmem [thread:$0]  %s2, 16384, %s42, [#allocation6], 256, 256, 16
    $region13: #{tpu_custom_call.1} parent=1 // pred_fallthru
      _
    // Predicated region
    $region14: #{tpu_custom_call.1} parent=1 // pred_check
      _
    $region15: #{tpu_custom_call.1} parent=1 // pred_check_branch
      %49 = sbr.rel (0) target = $region17
    $region16: #{tpu_custom_call.1} parent=1 // pred_region
      _
    $region17: #{tpu_custom_call.1} parent=1 // pred_fallthru
      _
    // Predicated region
    $region18: #{tpu_custom_call.1} parent=1 // pred_check
      _
    $region19: #{tpu_custom_call.1} parent=1 // pred_check_branch
      %51 = sbr.rel (0) target = $region21
    $region20: #{tpu_custom_call.1} parent=1 // pred_region
      %s53 = ssub.s32 128, 128
      %54 = vsyncadd [#allocation9], %s53
      %s56 = sshll.u32 [#allocation8], 4
      %s57 = int_to_ptr.vmem [resolvable:$true] %s56
      %59 = dma.hbm_to_vmem [thread:$0]  %s4, 128, %s57, [#allocation9]
    $region21: #{tpu_custom_call.1} parent=1 // pred_fallthru
      _
    // Predicated region
    $region22: #{tpu_custom_call.1} parent=1 // pred_check
      _
    $region23: #{tpu_custom_call.1} parent=1 // pred_check_branch
      %61 = sbr.rel (0) target = $region25
    $region24: #{tpu_custom_call.1} parent=1 // pred_region
      %62 = dma.done [#allocation3], 256
    $region25: #{tpu_custom_call.1} parent=1 // pred_fallthru
      _
    // Predicated region
    $region26: #{tpu_custom_call.1} parent=1 // pred_check
      _
    $region27: #{tpu_custom_call.1} parent=1 // pred_check_branch
      %64 = sbr.rel (0) target = $region29
    $region28: #{tpu_custom_call.1} parent=1 // pred_region
      %65 = dma.done [#allocation6], 32768
    $region29: #{tpu_custom_call.1} parent=1 // pred_fallthru
      _
    // Predicated region
    $region30: #{tpu_custom_call.1} parent=1 // pred_check
      _
    $region31: #{tpu_custom_call.1} parent=1 // pred_check_branch
      %67 = sbr.rel (0) target = $region33
    $region32: #{tpu_custom_call.1} parent=1 // pred_region
      %68 = dma.done [#allocation6], 16384
    $region33: #{tpu_custom_call.1} parent=1 // pred_fallthru
      _
    // Predicated region
    $region34: #{tpu_custom_call.1} parent=1 // pred_check
      _
    $region35: #{tpu_custom_call.1} parent=1 // pred_check_branch
      %70 = sbr.rel (0) target = $region37
    $region36: #{tpu_custom_call.1} parent=1 // pred_region
      %71 = dma.done [#allocation9], 128
    $region37: #{tpu_custom_call.1} parent=1 // pred_fallthru
      _
    %v73 = vld [vmem:[#allocation2] sm:$0xff]
    %v74 = vld [vmem:[#allocation2 + $0x8] sm:$0xff]
    %v75 = vld [vmem:[#allocation5] sm:$0xff]
    %v76 = vld [vmem:[#allocation5 + $0x8] sm:$0xff]
    %v77 = vld [vmem:[#allocation5 + $0x10] sm:$0xff]
    %v78 = vld [vmem:[#allocation5 + $0x18] sm:$0xff]
    %v79 = vld [vmem:[#allocation5 + $0x20] sm:$0xff]
    %v80 = vld [vmem:[#allocation5 + $0x28] sm:$0xff]
    %v81 = vld [vmem:[#allocation5 + $0x30] sm:$0xff]
    %v82 = vld [vmem:[#allocation5 + $0x38] sm:$0xff]
    %v83 = vld [vmem:[#allocation5 + $0x40] sm:$0xff]
    %v84 = vld [vmem:[#allocation5 + $0x48] sm:$0xff]
    %v85 = vld [vmem:[#allocation5 + $0x50] sm:$0xff]
    %v86 = vld [vmem:[#allocation5 + $0x58] sm:$0xff]
    %v87 = vld [vmem:[#allocation5 + $0x60] sm:$0xff]
    %v88 = vld [vmem:[#allocation5 + $0x68] sm:$0xff]
    %v89 = vld [vmem:[#allocation5 + $0x70] sm:$0xff]
    %v90 = vld [vmem:[#allocation5 + $0x78] sm:$0xff]
    %v91 = vld [vmem:[#allocation5 + $0x80] sm:$0xff]
    %v92 = vld [vmem:[#allocation5 + $0x88] sm:$0xff]
    %v93 = vld [vmem:[#allocation5 + $0x90] sm:$0xff]
    %v94 = vld [vmem:[#allocation5 + $0x98] sm:$0xff]
    %v95 = vld [vmem:[#allocation5 + $0xa0] sm:$0xff]
    %v96 = vld [vmem:[#allocation5 + $0xa8] sm:$0xff]
    %v97 = vld [vmem:[#allocation5 + $0xb0] sm:$0xff]
    %v98 = vld [vmem:[#allocation5 + $0xb8] sm:$0xff]
    %v99 = vld [vmem:[#allocation5 + $0xc0] sm:$0xff]
    %v100 = vld [vmem:[#allocation5 + $0xc8] sm:$0xff]
    %v101 = vld [vmem:[#allocation5 + $0xd0] sm:$0xff]
    %v102 = vld [vmem:[#allocation5 + $0xd8] sm:$0xff]
    %v103 = vld [vmem:[#allocation5 + $0xe0] sm:$0xff]
    %v104 = vld [vmem:[#allocation5 + $0xe8] sm:$0xff]
    %v105 = vld [vmem:[#allocation5 + $0xf0] sm:$0xff]
    %v106 = vld [vmem:[#allocation5 + $0xf8] sm:$0xff]
    %v107 = vld [vmem:[#allocation5 + $0x100] sm:$0xff]
    %v108 = vld [vmem:[#allocation5 + $0x108] sm:$0xff]
    %v109 = vld [vmem:[#allocation5 + $0x110] sm:$0xff]
    %v110 = vld [vmem:[#allocation5 + $0x118] sm:$0xff]
    %v111 = vld [vmem:[#allocation5 + $0x120] sm:$0xff]
    %v112 = vld [vmem:[#allocation5 + $0x128] sm:$0xff]
    %v113 = vld [vmem:[#allocation5 + $0x130] sm:$0xff]
    %v114 = vld [vmem:[#allocation5 + $0x138] sm:$0xff]
    %v115 = vld [vmem:[#allocation5 + $0x140] sm:$0xff]
    %v116 = vld [vmem:[#allocation5 + $0x148] sm:$0xff]
    %v117 = vld [vmem:[#allocation5 + $0x150] sm:$0xff]
    %v118 = vld [vmem:[#allocation5 + $0x158] sm:$0xff]
    %v119 = vld [vmem:[#allocation5 + $0x160] sm:$0xff]
    %v120 = vld [vmem:[#allocation5 + $0x168] sm:$0xff]
    %v121 = vld [vmem:[#allocation5 + $0x170] sm:$0xff]
    %v122 = vld [vmem:[#allocation5 + $0x178] sm:$0xff]
    %v123 = vld [vmem:[#allocation5 + $0x180] sm:$0xff]
    %v124 = vld [vmem:[#allocation5 + $0x188] sm:$0xff]
    %v125 = vld [vmem:[#allocation5 + $0x190] sm:$0xff]
    %v126 = vld [vmem:[#allocation5 + $0x198] sm:$0xff]
    %v127 = vld [vmem:[#allocation5 + $0x1a0] sm:$0xff]
    %v128 = vld [vmem:[#allocation5 + $0x1a8] sm:$0xff]
    %v129 = vld [vmem:[#allocation5 + $0x1b0] sm:$0xff]
    %v130 = vld [vmem:[#allocation5 + $0x1b8] sm:$0xff]
    %v131 = vld [vmem:[#allocation5 + $0x1c0] sm:$0xff]
    %v132 = vld [vmem:[#allocation5 + $0x1c8] sm:$0xff]
    %v133 = vld [vmem:[#allocation5 + $0x1d0] sm:$0xff]
    %v134 = vld [vmem:[#allocation5 + $0x1d8] sm:$0xff]
    %v135 = vld [vmem:[#allocation5 + $0x1e0] sm:$0xff]
    %v136 = vld [vmem:[#allocation5 + $0x1e8] sm:$0xff]
    %v137 = vld [vmem:[#allocation5 + $0x1f0] sm:$0xff]
    %v138 = vld [vmem:[#allocation5 + $0x1f8] sm:$0xff]
    %v139 = vld [vmem:[#allocation5 + $0x200] sm:$0xff]
    %v140 = vld [vmem:[#allocation5 + $0x208] sm:$0xff]
    %v141 = vld [vmem:[#allocation5 + $0x210] sm:$0xff]
    %v142 = vld [vmem:[#allocation5 + $0x218] sm:$0xff]
    %v143 = vld [vmem:[#allocation5 + $0x220] sm:$0xff]
    %v144 = vld [vmem:[#allocation5 + $0x228] sm:$0xff]
    %v145 = vld [vmem:[#allocation5 + $0x230] sm:$0xff]
    %v146 = vld [vmem:[#allocation5 + $0x238] sm:$0xff]
    %v147 = vld [vmem:[#allocation5 + $0x240] sm:$0xff]
    %v148 = vld [vmem:[#allocation5 + $0x248] sm:$0xff]
    %v149 = vld [vmem:[#allocation5 + $0x250] sm:$0xff]
    %v150 = vld [vmem:[#allocation5 + $0x258] sm:$0xff]
    %v151 = vld [vmem:[#allocation5 + $0x260] sm:$0xff]
    %v152 = vld [vmem:[#allocation5 + $0x268] sm:$0xff]
    %v153 = vld [vmem:[#allocation5 + $0x270] sm:$0xff]
    %v154 = vld [vmem:[#allocation5 + $0x278] sm:$0xff]
    %v155 = vld [vmem:[#allocation5 + $0x280] sm:$0xff]
    %v156 = vld [vmem:[#allocation5 + $0x288] sm:$0xff]
    %v157 = vld [vmem:[#allocation5 + $0x290] sm:$0xff]
    %v158 = vld [vmem:[#allocation5 + $0x298] sm:$0xff]
    %v159 = vld [vmem:[#allocation5 + $0x2a0] sm:$0xff]
    %v160 = vld [vmem:[#allocation5 + $0x2a8] sm:$0xff]
    %v161 = vld [vmem:[#allocation5 + $0x2b0] sm:$0xff]
    %v162 = vld [vmem:[#allocation5 + $0x2b8] sm:$0xff]
    %v163 = vld [vmem:[#allocation5 + $0x2c0] sm:$0xff]
    %v164 = vld [vmem:[#allocation5 + $0x2c8] sm:$0xff]
    %v165 = vld [vmem:[#allocation5 + $0x2d0] sm:$0xff]
    %v166 = vld [vmem:[#allocation5 + $0x2d8] sm:$0xff]
    %v167 = vld [vmem:[#allocation5 + $0x2e0] sm:$0xff]
    %v168 = vld [vmem:[#allocation5 + $0x2e8] sm:$0xff]
    %v169 = vld [vmem:[#allocation5 + $0x2f0] sm:$0xff]
    %v170 = vld [vmem:[#allocation5 + $0x2f8] sm:$0xff]
    %v171 = vld [vmem:[#allocation5 + $0x300] sm:$0xff]
    %v172 = vld [vmem:[#allocation5 + $0x308] sm:$0xff]
    %v173 = vld [vmem:[#allocation5 + $0x310] sm:$0xff]
    %v174 = vld [vmem:[#allocation5 + $0x318] sm:$0xff]
    %v175 = vld [vmem:[#allocation5 + $0x320] sm:$0xff]
    %v176 = vld [vmem:[#allocation5 + $0x328] sm:$0xff]
    %v177 = vld [vmem:[#allocation5 + $0x330] sm:$0xff]
    %v178 = vld [vmem:[#allocation5 + $0x338] sm:$0xff]
    %v179 = vld [vmem:[#allocation5 + $0x340] sm:$0xff]
    %v180 = vld [vmem:[#allocation5 + $0x348] sm:$0xff]
    %v181 = vld [vmem:[#allocation5 + $0x350] sm:$0xff]
    %v182 = vld [vmem:[#allocation5 + $0x358] sm:$0xff]
    %v183 = vld [vmem:[#allocation5 + $0x360] sm:$0xff]
    %v184 = vld [vmem:[#allocation5 + $0x368] sm:$0xff]
    %v185 = vld [vmem:[#allocation5 + $0x370] sm:$0xff]
    %v186 = vld [vmem:[#allocation5 + $0x378] sm:$0xff]
    %v187 = vld [vmem:[#allocation5 + $0x380] sm:$0xff]
    %v188 = vld [vmem:[#allocation5 + $0x388] sm:$0xff]
    %v189 = vld [vmem:[#allocation5 + $0x390] sm:$0xff]
    %v190 = vld [vmem:[#allocation5 + $0x398] sm:$0xff]
    %v191 = vld [vmem:[#allocation5 + $0x3a0] sm:$0xff]
    %v192 = vld [vmem:[#allocation5 + $0x3a8] sm:$0xff]
    %v193 = vld [vmem:[#allocation5 + $0x3b0] sm:$0xff]
    %v194 = vld [vmem:[#allocation5 + $0x3b8] sm:$0xff]
    %v195 = vld [vmem:[#allocation5 + $0x3c0] sm:$0xff]
    %v196 = vld [vmem:[#allocation5 + $0x3c8] sm:$0xff]
    %v197 = vld [vmem:[#allocation5 + $0x3d0] sm:$0xff]
    %v198 = vld [vmem:[#allocation5 + $0x3d8] sm:$0xff]
    %v199 = vld [vmem:[#allocation5 + $0x3e0] sm:$0xff]
    %v200 = vld [vmem:[#allocation5 + $0x3e8] sm:$0xff]
    %v201 = vld [vmem:[#allocation5 + $0x3f0] sm:$0xff]
    %v202 = vld [vmem:[#allocation5 + $0x3f8] sm:$0xff]
    %v203 = vld [vmem:[#allocation5 + $0x400] sm:$0xff]
    %v204 = vld [vmem:[#allocation5 + $0x408] sm:$0xff]
    %v205 = vld [vmem:[#allocation5 + $0x410] sm:$0xff]
    %v206 = vld [vmem:[#allocation5 + $0x418] sm:$0xff]
    %v207 = vld [vmem:[#allocation5 + $0x420] sm:$0xff]
    %v208 = vld [vmem:[#allocation5 + $0x428] sm:$0xff]
    %v209 = vld [vmem:[#allocation5 + $0x430] sm:$0xff]
    %v210 = vld [vmem:[#allocation5 + $0x438] sm:$0xff]
    %v211 = vld [vmem:[#allocation5 + $0x440] sm:$0xff]
    %v212 = vld [vmem:[#allocation5 + $0x448] sm:$0xff]
    %v213 = vld [vmem:[#allocation5 + $0x450] sm:$0xff]
    %v214 = vld [vmem:[#allocation5 + $0x458] sm:$0xff]
    %v215 = vld [vmem:[#allocation5 + $0x460] sm:$0xff]
    %v216 = vld [vmem:[#allocation5 + $0x468] sm:$0xff]
    %v217 = vld [vmem:[#allocation5 + $0x470] sm:$0xff]
    %v218 = vld [vmem:[#allocation5 + $0x478] sm:$0xff]
    %v219 = vld [vmem:[#allocation5 + $0x480] sm:$0xff]
    %v220 = vld [vmem:[#allocation5 + $0x488] sm:$0xff]
    %v221 = vld [vmem:[#allocation5 + $0x490] sm:$0xff]
    %v222 = vld [vmem:[#allocation5 + $0x498] sm:$0xff]
    %v223 = vld [vmem:[#allocation5 + $0x4a0] sm:$0xff]
    %v224 = vld [vmem:[#allocation5 + $0x4a8] sm:$0xff]
    %v225 = vld [vmem:[#allocation5 + $0x4b0] sm:$0xff]
    %v226 = vld [vmem:[#allocation5 + $0x4b8] sm:$0xff]
    %v227 = vld [vmem:[#allocation5 + $0x4c0] sm:$0xff]
    %v228 = vld [vmem:[#allocation5 + $0x4c8] sm:$0xff]
    %v229 = vld [vmem:[#allocation5 + $0x4d0] sm:$0xff]
    %v230 = vld [vmem:[#allocation5 + $0x4d8] sm:$0xff]
    %v231 = vld [vmem:[#allocation5 + $0x4e0] sm:$0xff]
    %v232 = vld [vmem:[#allocation5 + $0x4e8] sm:$0xff]
    %v233 = vld [vmem:[#allocation5 + $0x4f0] sm:$0xff]
    %v234 = vld [vmem:[#allocation5 + $0x4f8] sm:$0xff]
    %v235 = vld [vmem:[#allocation5 + $0x500] sm:$0xff]
    %v236 = vld [vmem:[#allocation5 + $0x508] sm:$0xff]
    %v237 = vld [vmem:[#allocation5 + $0x510] sm:$0xff]
    %v238 = vld [vmem:[#allocation5 + $0x518] sm:$0xff]
    %v239 = vld [vmem:[#allocation5 + $0x520] sm:$0xff]
    %v240 = vld [vmem:[#allocation5 + $0x528] sm:$0xff]
    %v241 = vld [vmem:[#allocation5 + $0x530] sm:$0xff]
    %v242 = vld [vmem:[#allocation5 + $0x538] sm:$0xff]
    %v243 = vld [vmem:[#allocation5 + $0x540] sm:$0xff]
    %v244 = vld [vmem:[#allocation5 + $0x548] sm:$0xff]
    %v245 = vld [vmem:[#allocation5 + $0x550] sm:$0xff]
    %v246 = vld [vmem:[#allocation5 + $0x558] sm:$0xff]
    %v247 = vld [vmem:[#allocation5 + $0x560] sm:$0xff]
    %v248 = vld [vmem:[#allocation5 + $0x568] sm:$0xff]
    %v249 = vld [vmem:[#allocation5 + $0x570] sm:$0xff]
    %v250 = vld [vmem:[#allocation5 + $0x578] sm:$0xff]
    %v251 = vld [vmem:[#allocation5 + $0x580] sm:$0xff]
    %v252 = vld [vmem:[#allocation5 + $0x588] sm:$0xff]
    %v253 = vld [vmem:[#allocation5 + $0x590] sm:$0xff]
    %v254 = vld [vmem:[#allocation5 + $0x598] sm:$0xff]
    %v255 = vld [vmem:[#allocation5 + $0x5a0] sm:$0xff]
    %v256 = vld [vmem:[#allocation5 + $0x5a8] sm:$0xff]
    %v257 = vld [vmem:[#allocation5 + $0x5b0] sm:$0xff]
    %v258 = vld [vmem:[#allocation5 + $0x5b8] sm:$0xff]
    %v259 = vld [vmem:[#allocation5 + $0x5c0] sm:$0xff]
    %v260 = vld [vmem:[#allocation5 + $0x5c8] sm:$0xff]
    %v261 = vld [vmem:[#allocation5 + $0x5d0] sm:$0xff]
    %v262 = vld [vmem:[#allocation5 + $0x5d8] sm:$0xff]
    %v263 = vld [vmem:[#allocation5 + $0x5e0] sm:$0xff]
    %v264 = vld [vmem:[#allocation5 + $0x5e8] sm:$0xff]
    %v265 = vld [vmem:[#allocation5 + $0x5f0] sm:$0xff]
    %v266 = vld [vmem:[#allocation5 + $0x5f8] sm:$0xff]
    %v267 = vld [vmem:[#allocation5 + $0x600] sm:$0xff]
    %v268 = vld [vmem:[#allocation5 + $0x608] sm:$0xff]
    %v269 = vld [vmem:[#allocation5 + $0x610] sm:$0xff]
    %v270 = vld [vmem:[#allocation5 + $0x618] sm:$0xff]
    %v271 = vld [vmem:[#allocation5 + $0x620] sm:$0xff]
    %v272 = vld [vmem:[#allocation5 + $0x628] sm:$0xff]
    %v273 = vld [vmem:[#allocation5 + $0x630] sm:$0xff]
    %v274 = vld [vmem:[#allocation5 + $0x638] sm:$0xff]
    %v275 = vld [vmem:[#allocation5 + $0x640] sm:$0xff]
    %v276 = vld [vmem:[#allocation5 + $0x648] sm:$0xff]
    %v277 = vld [vmem:[#allocation5 + $0x650] sm:$0xff]
    %v278 = vld [vmem:[#allocation5 + $0x658] sm:$0xff]
    %v279 = vld [vmem:[#allocation5 + $0x660] sm:$0xff]
    %v280 = vld [vmem:[#allocation5 + $0x668] sm:$0xff]
    %v281 = vld [vmem:[#allocation5 + $0x670] sm:$0xff]
    %v282 = vld [vmem:[#allocation5 + $0x678] sm:$0xff]
    %v283 = vld [vmem:[#allocation5 + $0x680] sm:$0xff]
    %v284 = vld [vmem:[#allocation5 + $0x688] sm:$0xff]
    %v285 = vld [vmem:[#allocation5 + $0x690] sm:$0xff]
    %v286 = vld [vmem:[#allocation5 + $0x698] sm:$0xff]
    %v287 = vld [vmem:[#allocation5 + $0x6a0] sm:$0xff]
    %v288 = vld [vmem:[#allocation5 + $0x6a8] sm:$0xff]
    %v289 = vld [vmem:[#allocation5 + $0x6b0] sm:$0xff]
    %v290 = vld [vmem:[#allocation5 + $0x6b8] sm:$0xff]
    %v291 = vld [vmem:[#allocation5 + $0x6c0] sm:$0xff]
    %v292 = vld [vmem:[#allocation5 + $0x6c8] sm:$0xff]
    %v293 = vld [vmem:[#allocation5 + $0x6d0] sm:$0xff]
    %v294 = vld [vmem:[#allocation5 + $0x6d8] sm:$0xff]
    %v295 = vld [vmem:[#allocation5 + $0x6e0] sm:$0xff]
    %v296 = vld [vmem:[#allocation5 + $0x6e8] sm:$0xff]
    %v297 = vld [vmem:[#allocation5 + $0x6f0] sm:$0xff]
    %v298 = vld [vmem:[#allocation5 + $0x6f8] sm:$0xff]
    %v299 = vld [vmem:[#allocation5 + $0x700] sm:$0xff]
    %v300 = vld [vmem:[#allocation5 + $0x708] sm:$0xff]
    %v301 = vld [vmem:[#allocation5 + $0x710] sm:$0xff]
    %v302 = vld [vmem:[#allocation5 + $0x718] sm:$0xff]
    %v303 = vld [vmem:[#allocation5 + $0x720] sm:$0xff]
    %v304 = vld [vmem:[#allocation5 + $0x728] sm:$0xff]
    %v305 = vld [vmem:[#allocation5 + $0x730] sm:$0xff]
    %v306 = vld [vmem:[#allocation5 + $0x738] sm:$0xff]
    %v307 = vld [vmem:[#allocation5 + $0x740] sm:$0xff]
    %v308 = vld [vmem:[#allocation5 + $0x748] sm:$0xff]
    %v309 = vld [vmem:[#allocation5 + $0x750] sm:$0xff]
    %v310 = vld [vmem:[#allocation5 + $0x758] sm:$0xff]
    %v311 = vld [vmem:[#allocation5 + $0x760] sm:$0xff]
    %v312 = vld [vmem:[#allocation5 + $0x768] sm:$0xff]
    %v313 = vld [vmem:[#allocation5 + $0x770] sm:$0xff]
    %v314 = vld [vmem:[#allocation5 + $0x778] sm:$0xff]
    %v315 = vld [vmem:[#allocation5 + $0x780] sm:$0xff]
    %v316 = vld [vmem:[#allocation5 + $0x788] sm:$0xff]
    %v317 = vld [vmem:[#allocation5 + $0x790] sm:$0xff]
    %v318 = vld [vmem:[#allocation5 + $0x798] sm:$0xff]
    %v319 = vld [vmem:[#allocation5 + $0x7a0] sm:$0xff]
    %v320 = vld [vmem:[#allocation5 + $0x7a8] sm:$0xff]
    %v321 = vld [vmem:[#allocation5 + $0x7b0] sm:$0xff]
    %v322 = vld [vmem:[#allocation5 + $0x7b8] sm:$0xff]
    %v323 = vld [vmem:[#allocation5 + $0x7c0] sm:$0xff]
    %v324 = vld [vmem:[#allocation5 + $0x7c8] sm:$0xff]
    %v325 = vld [vmem:[#allocation5 + $0x7d0] sm:$0xff]
    %v326 = vld [vmem:[#allocation5 + $0x7d8] sm:$0xff]
    %v327 = vld [vmem:[#allocation5 + $0x7e0] sm:$0xff]
    %v328 = vld [vmem:[#allocation5 + $0x7e8] sm:$0xff]
    %v329 = vld [vmem:[#allocation5 + $0x7f0] sm:$0xff]
    %v330 = vld [vmem:[#allocation5 + $0x7f8] sm:$0xff]
    %v333 = vunpack.c.l.b16 %v73
    %v334 = vunpack.c.h.b16 %v73
    %v335 = vunpack.c.l.b16 %v74
    %v336 = vunpack.c.h.b16 %v74
    %v337 = vpack.c.b16 %v333, %v333
    %v338 = vpack.c.b16 %v334, %v334
    %v339 = vpack.c.b16 %v335, %v335
    %v340 = vpack.c.b16 %v336, %v336
    %v601 = vunpack.c.l.b16 %v75
    %v602 = vunpack.c.h.b16 %v75
    %v603 = vunpack.c.l.b16 %v76
    %v604 = vunpack.c.h.b16 %v76
    %v605 = vunpack.c.l.b16 %v77
    %v606 = vunpack.c.h.b16 %v77
    %v607 = vunpack.c.l.b16 %v78
    %v608 = vunpack.c.h.b16 %v78
    %v609 = vunpack.c.l.b16 %v79
    %v610 = vunpack.c.h.b16 %v79
    %v611 = vunpack.c.l.b16 %v80
    %v612 = vunpack.c.h.b16 %v80
    %v613 = vunpack.c.l.b16 %v81
    %v614 = vunpack.c.h.b16 %v81
    %v615 = vunpack.c.l.b16 %v82
    %v616 = vunpack.c.h.b16 %v82
    %v617 = vunpack.c.l.b16 %v83
    %v618 = vunpack.c.h.b16 %v83
    %v619 = vunpack.c.l.b16 %v84
    %v620 = vunpack.c.h.b16 %v84
    %v621 = vunpack.c.l.b16 %v85
    %v622 = vunpack.c.h.b16 %v85
    %v623 = vunpack.c.l.b16 %v86
    %v624 = vunpack.c.h.b16 %v86
    %v625 = vunpack.c.l.b16 %v87
    %v626 = vunpack.c.h.b16 %v87
    %v627 = vunpack.c.l.b16 %v88
    %v628 = vunpack.c.h.b16 %v88
    %v629 = vunpack.c.l.b16 %v89
    %v630 = vunpack.c.h.b16 %v89
    %v631 = vunpack.c.l.b16 %v90
    %v632 = vunpack.c.h.b16 %v90
    %v633 = vunpack.c.l.b16 %v91
    %v634 = vunpack.c.h.b16 %v91
    %v635 = vunpack.c.l.b16 %v92
    %v636 = vunpack.c.h.b16 %v92
    %v637 = vunpack.c.l.b16 %v93
    %v638 = vunpack.c.h.b16 %v93
    %v639 = vunpack.c.l.b16 %v94
    %v640 = vunpack.c.h.b16 %v94
    %v641 = vunpack.c.l.b16 %v95
    %v642 = vunpack.c.h.b16 %v95
    %v643 = vunpack.c.l.b16 %v96
    %v644 = vunpack.c.h.b16 %v96
    %v645 = vunpack.c.l.b16 %v97
    %v646 = vunpack.c.h.b16 %v97
    %v647 = vunpack.c.l.b16 %v98
    %v648 = vunpack.c.h.b16 %v98
    %v649 = vunpack.c.l.b16 %v99
    %v650 = vunpack.c.h.b16 %v99
    %v651 = vunpack.c.l.b16 %v100
    %v652 = vunpack.c.h.b16 %v100
    %v653 = vunpack.c.l.b16 %v101
    %v654 = vunpack.c.h.b16 %v101
    %v655 = vunpack.c.l.b16 %v102
    %v656 = vunpack.c.h.b16 %v102
    %v657 = vunpack.c.l.b16 %v103
    %v658 = vunpack.c.h.b16 %v103
    %v659 = vunpack.c.l.b16 %v104
    %v660 = vunpack.c.h.b16 %v104
    %v661 = vunpack.c.l.b16 %v105
    %v662 = vunpack.c.h.b16 %v105
    %v663 = vunpack.c.l.b16 %v106
    %v664 = vunpack.c.h.b16 %v106
    %v665 = vunpack.c.l.b16 %v107
    %v666 = vunpack.c.h.b16 %v107
    %v667 = vunpack.c.l.b16 %v108
    %v668 = vunpack.c.h.b16 %v108
    %v669 = vunpack.c.l.b16 %v109
    %v670 = vunpack.c.h.b16 %v109
    %v671 = vunpack.c.l.b16 %v110
    %v672 = vunpack.c.h.b16 %v110
    %v673 = vunpack.c.l.b16 %v111
    %v674 = vunpack.c.h.b16 %v111
    %v675 = vunpack.c.l.b16 %v112
    %v676 = vunpack.c.h.b16 %v112
    %v677 = vunpack.c.l.b16 %v113
    %v678 = vunpack.c.h.b16 %v113
    %v679 = vunpack.c.l.b16 %v114
    %v680 = vunpack.c.h.b16 %v114
    %v681 = vunpack.c.l.b16 %v115
    %v682 = vunpack.c.h.b16 %v115
    %v683 = vunpack.c.l.b16 %v116
    %v684 = vunpack.c.h.b16 %v116
    %v685 = vunpack.c.l.b16 %v117
    %v686 = vunpack.c.h.b16 %v117
    %v687 = vunpack.c.l.b16 %v118
    %v688 = vunpack.c.h.b16 %v118
    %v689 = vunpack.c.l.b16 %v119
    %v690 = vunpack.c.h.b16 %v119
    %v691 = vunpack.c.l.b16 %v120
    %v692 = vunpack.c.h.b16 %v120
    %v693 = vunpack.c.l.b16 %v121
    %v694 = vunpack.c.h.b16 %v121
    %v695 = vunpack.c.l.b16 %v122
    %v696 = vunpack.c.h.b16 %v122
    %v697 = vunpack.c.l.b16 %v123
    %v698 = vunpack.c.h.b16 %v123
    %v699 = vunpack.c.l.b16 %v124
    %v700 = vunpack.c.h.b16 %v124
    %v701 = vunpack.c.l.b16 %v125
    %v702 = vunpack.c.h.b16 %v125
    %v703 = vunpack.c.l.b16 %v126
    %v704 = vunpack.c.h.b16 %v126
    %v705 = vunpack.c.l.b16 %v127
    %v706 = vunpack.c.h.b16 %v127
    %v707 = vunpack.c.l.b16 %v128
    %v708 = vunpack.c.h.b16 %v128
    %v709 = vunpack.c.l.b16 %v129
    %v710 = vunpack.c.h.b16 %v129
    %v711 = vunpack.c.l.b16 %v130
    %v712 = vunpack.c.h.b16 %v130
    %v713 = vunpack.c.l.b16 %v131
    %v714 = vunpack.c.h.b16 %v131
    %v715 = vunpack.c.l.b16 %v132
    %v716 = vunpack.c.h.b16 %v132
    %v717 = vunpack.c.l.b16 %v133
    %v718 = vunpack.c.h.b16 %v133
    %v719 = vunpack.c.l.b16 %v134
    %v720 = vunpack.c.h.b16 %v134
    %v721 = vunpack.c.l.b16 %v135
    %v722 = vunpack.c.h.b16 %v135
    %v723 = vunpack.c.l.b16 %v136
    %v724 = vunpack.c.h.b16 %v136
    %v725 = vunpack.c.l.b16 %v137
    %v726 = vunpack.c.h.b16 %v137
    %v727 = vunpack.c.l.b16 %v138
    %v728 = vunpack.c.h.b16 %v138
    %v729 = vunpack.c.l.b16 %v139
    %v730 = vunpack.c.h.b16 %v139
    %v731 = vunpack.c.l.b16 %v140
    %v732 = vunpack.c.h.b16 %v140
    %v733 = vunpack.c.l.b16 %v141
    %v734 = vunpack.c.h.b16 %v141
    %v735 = vunpack.c.l.b16 %v142
    %v736 = vunpack.c.h.b16 %v142
    %v737 = vunpack.c.l.b16 %v143
    %v738 = vunpack.c.h.b16 %v143
    %v739 = vunpack.c.l.b16 %v144
    %v740 = vunpack.c.h.b16 %v144
    %v741 = vunpack.c.l.b16 %v145
    %v742 = vunpack.c.h.b16 %v145
    %v743 = vunpack.c.l.b16 %v146
    %v744 = vunpack.c.h.b16 %v146
    %v745 = vunpack.c.l.b16 %v147
    %v746 = vunpack.c.h.b16 %v147
    %v747 = vunpack.c.l.b16 %v148
    %v748 = vunpack.c.h.b16 %v148
    %v749 = vunpack.c.l.b16 %v149
    %v750 = vunpack.c.h.b16 %v149
    %v751 = vunpack.c.l.b16 %v150
    %v752 = vunpack.c.h.b16 %v150
    %v753 = vunpack.c.l.b16 %v151
    %v754 = vunpack.c.h.b16 %v151
    %v755 = vunpack.c.l.b16 %v152
    %v756 = vunpack.c.h.b16 %v152
    %v757 = vunpack.c.l.b16 %v153
    %v758 = vunpack.c.h.b16 %v153
    %v759 = vunpack.c.l.b16 %v154
    %v760 = vunpack.c.h.b16 %v154
    %v761 = vunpack.c.l.b16 %v155
    %v762 = vunpack.c.h.b16 %v155
    %v763 = vunpack.c.l.b16 %v156
    %v764 = vunpack.c.h.b16 %v156
    %v765 = vunpack.c.l.b16 %v157
    %v766 = vunpack.c.h.b16 %v157
    %v767 = vunpack.c.l.b16 %v158
    %v768 = vunpack.c.h.b16 %v158
    %v769 = vunpack.c.l.b16 %v159
    %v770 = vunpack.c.h.b16 %v159
    %v771 = vunpack.c.l.b16 %v160
    %v772 = vunpack.c.h.b16 %v160
    %v773 = vunpack.c.l.b16 %v161
    %v774 = vunpack.c.h.b16 %v161
    %v775 = vunpack.c.l.b16 %v162
    %v776 = vunpack.c.h.b16 %v162
    %v777 = vunpack.c.l.b16 %v163
    %v778 = vunpack.c.h.b16 %v163
    %v779 = vunpack.c.l.b16 %v164
    %v780 = vunpack.c.h.b16 %v164
    %v781 = vunpack.c.l.b16 %v165
    %v782 = vunpack.c.h.b16 %v165
    %v783 = vunpack.c.l.b16 %v166
    %v784 = vunpack.c.h.b16 %v166
    %v785 = vunpack.c.l.b16 %v167
    %v786 = vunpack.c.h.b16 %v167
    %v787 = vunpack.c.l.b16 %v168
    %v788 = vunpack.c.h.b16 %v168
    %v789 = vunpack.c.l.b16 %v169
    %v790 = vunpack.c.h.b16 %v169
    %v791 = vunpack.c.l.b16 %v170
    %v792 = vunpack.c.h.b16 %v170
    %v793 = vunpack.c.l.b16 %v171
    %v794 = vunpack.c.h.b16 %v171
    %v795 = vunpack.c.l.b16 %v172
    %v796 = vunpack.c.h.b16 %v172
    %v797 = vunpack.c.l.b16 %v173
    %v798 = vunpack.c.h.b16 %v173
    %v799 = vunpack.c.l.b16 %v174
    %v800 = vunpack.c.h.b16 %v174
    %v801 = vunpack.c.l.b16 %v175
    %v802 = vunpack.c.h.b16 %v175
    %v803 = vunpack.c.l.b16 %v176
    %v804 = vunpack.c.h.b16 %v176
    %v805 = vunpack.c.l.b16 %v177
    %v806 = vunpack.c.h.b16 %v177
    %v807 = vunpack.c.l.b16 %v178
    %v808 = vunpack.c.h.b16 %v178
    %v809 = vunpack.c.l.b16 %v179
    %v810 = vunpack.c.h.b16 %v179
    %v811 = vunpack.c.l.b16 %v180
    %v812 = vunpack.c.h.b16 %v180
    %v813 = vunpack.c.l.b16 %v181
    %v814 = vunpack.c.h.b16 %v181
    %v815 = vunpack.c.l.b16 %v182
    %v816 = vunpack.c.h.b16 %v182
    %v817 = vunpack.c.l.b16 %v183
    %v818 = vunpack.c.h.b16 %v183
    %v819 = vunpack.c.l.b16 %v184
    %v820 = vunpack.c.h.b16 %v184
    %v821 = vunpack.c.l.b16 %v185
    %v822 = vunpack.c.h.b16 %v185
    %v823 = vunpack.c.l.b16 %v186
    %v824 = vunpack.c.h.b16 %v186
    %v825 = vunpack.c.l.b16 %v187
    %v826 = vunpack.c.h.b16 %v187
    %v827 = vunpack.c.l.b16 %v188
    %v828 = vunpack.c.h.b16 %v188
    %v829 = vunpack.c.l.b16 %v189
    %v830 = vunpack.c.h.b16 %v189
    %v831 = vunpack.c.l.b16 %v190
    %v832 = vunpack.c.h.b16 %v190
    %v833 = vunpack.c.l.b16 %v191
    %v834 = vunpack.c.h.b16 %v191
    %v835 = vunpack.c.l.b16 %v192
    %v836 = vunpack.c.h.b16 %v192
    %v837 = vunpack.c.l.b16 %v193
    %v838 = vunpack.c.h.b16 %v193
    %v839 = vunpack.c.l.b16 %v194
    %v840 = vunpack.c.h.b16 %v194
    %v841 = vunpack.c.l.b16 %v195
    %v842 = vunpack.c.h.b16 %v195
    %v843 = vunpack.c.l.b16 %v196
    %v844 = vunpack.c.h.b16 %v196
    %v845 = vunpack.c.l.b16 %v197
    %v846 = vunpack.c.h.b16 %v197
    %v847 = vunpack.c.l.b16 %v198
    %v848 = vunpack.c.h.b16 %v198
    %v849 = vunpack.c.l.b16 %v199
    %v850 = vunpack.c.h.b16 %v199
    %v851 = vunpack.c.l.b16 %v200
    %v852 = vunpack.c.h.b16 %v200
    %v853 = vunpack.c.l.b16 %v201
    %v854 = vunpack.c.h.b16 %v201
    %v855 = vunpack.c.l.b16 %v202
    %v856 = vunpack.c.h.b16 %v202
    %v857 = vunpack.c.l.b16 %v203
    %v858 = vunpack.c.h.b16 %v203
    %v859 = vunpack.c.l.b16 %v204
    %v860 = vunpack.c.h.b16 %v204
    %v861 = vunpack.c.l.b16 %v205
    %v862 = vunpack.c.h.b16 %v205
    %v863 = vunpack.c.l.b16 %v206
    %v864 = vunpack.c.h.b16 %v206
    %v865 = vunpack.c.l.b16 %v207
    %v866 = vunpack.c.h.b16 %v207
    %v867 = vunpack.c.l.b16 %v208
    %v868 = vunpack.c.h.b16 %v208
    %v869 = vunpack.c.l.b16 %v209
    %v870 = vunpack.c.h.b16 %v209
    %v871 = vunpack.c.l.b16 %v210
    %v872 = vunpack.c.h.b16 %v210
    %v873 = vunpack.c.l.b16 %v211
    %v874 = vunpack.c.h.b16 %v211
    %v875 = vunpack.c.l.b16 %v212
    %v876 = vunpack.c.h.b16 %v212
    %v877 = vunpack.c.l.b16 %v213
    %v878 = vunpack.c.h.b16 %v213
    %v879 = vunpack.c.l.b16 %v214
    %v880 = vunpack.c.h.b16 %v214
    %v881 = vunpack.c.l.b16 %v215
    %v882 = vunpack.c.h.b16 %v215
    %v883 = vunpack.c.l.b16 %v216
    %v884 = vunpack.c.h.b16 %v216
    %v885 = vunpack.c.l.b16 %v217
    %v886 = vunpack.c.h.b16 %v217
    %v887 = vunpack.c.l.b16 %v218
    %v888 = vunpack.c.h.b16 %v218
    %v889 = vunpack.c.l.b16 %v219
    %v890 = vunpack.c.h.b16 %v219
    %v891 = vunpack.c.l.b16 %v220
    %v892 = vunpack.c.h.b16 %v220
    %v893 = vunpack.c.l.b16 %v221
    %v894 = vunpack.c.h.b16 %v221
    %v895 = vunpack.c.l.b16 %v222
    %v896 = vunpack.c.h.b16 %v222
    %v897 = vunpack.c.l.b16 %v223
    %v898 = vunpack.c.h.b16 %v223
    %v899 = vunpack.c.l.b16 %v224
    %v900 = vunpack.c.h.b16 %v224
    %v901 = vunpack.c.l.b16 %v225
    %v902 = vunpack.c.h.b16 %v225
    %v903 = vunpack.c.l.b16 %v226
    %v904 = vunpack.c.h.b16 %v226
    %v905 = vunpack.c.l.b16 %v227
    %v906 = vunpack.c.h.b16 %v227
    %v907 = vunpack.c.l.b16 %v228
    %v908 = vunpack.c.h.b16 %v228
    %v909 = vunpack.c.l.b16 %v229
    %v910 = vunpack.c.h.b16 %v229
    %v911 = vunpack.c.l.b16 %v230
    %v912 = vunpack.c.h.b16 %v230
    %v913 = vunpack.c.l.b16 %v231
    %v914 = vunpack.c.h.b16 %v231
    %v915 = vunpack.c.l.b16 %v232
    %v916 = vunpack.c.h.b16 %v232
    %v917 = vunpack.c.l.b16 %v233
    %v918 = vunpack.c.h.b16 %v233
    %v919 = vunpack.c.l.b16 %v234
    %v920 = vunpack.c.h.b16 %v234
    %v921 = vunpack.c.l.b16 %v235
    %v922 = vunpack.c.h.b16 %v235
    %v923 = vunpack.c.l.b16 %v236
    %v924 = vunpack.c.h.b16 %v236
    %v925 = vunpack.c.l.b16 %v237
    %v926 = vunpack.c.h.b16 %v237
    %v927 = vunpack.c.l.b16 %v238
    %v928 = vunpack.c.h.b16 %v238
    %v929 = vunpack.c.l.b16 %v239
    %v930 = vunpack.c.h.b16 %v239
    %v931 = vunpack.c.l.b16 %v240
    %v932 = vunpack.c.h.b16 %v240
    %v933 = vunpack.c.l.b16 %v241
    %v934 = vunpack.c.h.b16 %v241
    %v935 = vunpack.c.l.b16 %v242
    %v936 = vunpack.c.h.b16 %v242
    %v937 = vunpack.c.l.b16 %v243
    %v938 = vunpack.c.h.b16 %v243
    %v939 = vunpack.c.l.b16 %v244
    %v940 = vunpack.c.h.b16 %v244
    %v941 = vunpack.c.l.b16 %v245
    %v942 = vunpack.c.h.b16 %v245
    %v943 = vunpack.c.l.b16 %v246
    %v944 = vunpack.c.h.b16 %v246
    %v945 = vunpack.c.l.b16 %v247
    %v946 = vunpack.c.h.b16 %v247
    %v947 = vunpack.c.l.b16 %v248
    %v948 = vunpack.c.h.b16 %v248
    %v949 = vunpack.c.l.b16 %v249
    %v950 = vunpack.c.h.b16 %v249
    %v951 = vunpack.c.l.b16 %v250
    %v952 = vunpack.c.h.b16 %v250
    %v953 = vunpack.c.l.b16 %v251
    %v954 = vunpack.c.h.b16 %v251
    %v955 = vunpack.c.l.b16 %v252
    %v956 = vunpack.c.h.b16 %v252
    %v957 = vunpack.c.l.b16 %v253
    %v958 = vunpack.c.h.b16 %v253
    %v959 = vunpack.c.l.b16 %v254
    %v960 = vunpack.c.h.b16 %v254
    %v961 = vunpack.c.l.b16 %v255
    %v962 = vunpack.c.h.b16 %v255
    %v963 = vunpack.c.l.b16 %v256
    %v964 = vunpack.c.h.b16 %v256
    %v965 = vunpack.c.l.b16 %v257
    %v966 = vunpack.c.h.b16 %v257
    %v967 = vunpack.c.l.b16 %v258
    %v968 = vunpack.c.h.b16 %v258
    %v969 = vunpack.c.l.b16 %v259
    %v970 = vunpack.c.h.b16 %v259
    %v971 = vunpack.c.l.b16 %v260
    %v972 = vunpack.c.h.b16 %v260
    %v973 = vunpack.c.l.b16 %v261
    %v974 = vunpack.c.h.b16 %v261
    %v975 = vunpack.c.l.b16 %v262
    %v976 = vunpack.c.h.b16 %v262
    %v977 = vunpack.c.l.b16 %v263
    %v978 = vunpack.c.h.b16 %v263
    %v979 = vunpack.c.l.b16 %v264
    %v980 = vunpack.c.h.b16 %v264
    %v981 = vunpack.c.l.b16 %v265
    %v982 = vunpack.c.h.b16 %v265
    %v983 = vunpack.c.l.b16 %v266
    %v984 = vunpack.c.h.b16 %v266
    %v985 = vunpack.c.l.b16 %v267
    %v986 = vunpack.c.h.b16 %v267
    %v987 = vunpack.c.l.b16 %v268
    %v988 = vunpack.c.h.b16 %v268
    %v989 = vunpack.c.l.b16 %v269
    %v990 = vunpack.c.h.b16 %v269
    %v991 = vunpack.c.l.b16 %v270
    %v992 = vunpack.c.h.b16 %v270
    %v993 = vunpack.c.l.b16 %v271
    %v994 = vunpack.c.h.b16 %v271
    %v995 = vunpack.c.l.b16 %v272
    %v996 = vunpack.c.h.b16 %v272
    %v997 = vunpack.c.l.b16 %v273
    %v998 = vunpack.c.h.b16 %v273
    %v999 = vunpack.c.l.b16 %v274
    %v1000 = vunpack.c.h.b16 %v274
    %v1001 = vunpack.c.l.b16 %v275
    %v1002 = vunpack.c.h.b16 %v275
    %v1003 = vunpack.c.l.b16 %v276
    %v1004 = vunpack.c.h.b16 %v276
    %v1005 = vunpack.c.l.b16 %v277
    %v1006 = vunpack.c.h.b16 %v277
    %v1007 = vunpack.c.l.b16 %v278
    %v1008 = vunpack.c.h.b16 %v278
    %v1009 = vunpack.c.l.b16 %v279
    %v1010 = vunpack.c.h.b16 %v279
    %v1011 = vunpack.c.l.b16 %v280
    %v1012 = vunpack.c.h.b16 %v280
    %v1013 = vunpack.c.l.b16 %v281
    %v1014 = vunpack.c.h.b16 %v281
    %v1015 = vunpack.c.l.b16 %v282
    %v1016 = vunpack.c.h.b16 %v282
    %v1017 = vunpack.c.l.b16 %v283
    %v1018 = vunpack.c.h.b16 %v283
    %v1019 = vunpack.c.l.b16 %v284
    %v1020 = vunpack.c.h.b16 %v284
    %v1021 = vunpack.c.l.b16 %v285
    %v1022 = vunpack.c.h.b16 %v285
    %v1023 = vunpack.c.l.b16 %v286
    %v1024 = vunpack.c.h.b16 %v286
    %v1025 = vunpack.c.l.b16 %v287
    %v1026 = vunpack.c.h.b16 %v287
    %v1027 = vunpack.c.l.b16 %v288
    %v1028 = vunpack.c.h.b16 %v288
    %v1029 = vunpack.c.l.b16 %v289
    %v1030 = vunpack.c.h.b16 %v289
    %v1031 = vunpack.c.l.b16 %v290
    %v1032 = vunpack.c.h.b16 %v290
    %v1033 = vunpack.c.l.b16 %v291
    %v1034 = vunpack.c.h.b16 %v291
    %v1035 = vunpack.c.l.b16 %v292
    %v1036 = vunpack.c.h.b16 %v292
    %v1037 = vunpack.c.l.b16 %v293
    %v1038 = vunpack.c.h.b16 %v293
    %v1039 = vunpack.c.l.b16 %v294
    %v1040 = vunpack.c.h.b16 %v294
    %v1041 = vunpack.c.l.b16 %v295
    %v1042 = vunpack.c.h.b16 %v295
    %v1043 = vunpack.c.l.b16 %v296
    %v1044 = vunpack.c.h.b16 %v296
    %v1045 = vunpack.c.l.b16 %v297
    %v1046 = vunpack.c.h.b16 %v297
    %v1047 = vunpack.c.l.b16 %v298
    %v1048 = vunpack.c.h.b16 %v298
    %v1049 = vunpack.c.l.b16 %v299
    %v1050 = vunpack.c.h.b16 %v299
    %v1051 = vunpack.c.l.b16 %v300
    %v1052 = vunpack.c.h.b16 %v300
    %v1053 = vunpack.c.l.b16 %v301
    %v1054 = vunpack.c.h.b16 %v301
    %v1055 = vunpack.c.l.b16 %v302
    %v1056 = vunpack.c.h.b16 %v302
    %v1057 = vunpack.c.l.b16 %v303
    %v1058 = vunpack.c.h.b16 %v303
    %v1059 = vunpack.c.l.b16 %v304
    %v1060 = vunpack.c.h.b16 %v304
    %v1061 = vunpack.c.l.b16 %v305
    %v1062 = vunpack.c.h.b16 %v305
    %v1063 = vunpack.c.l.b16 %v306
    %v1064 = vunpack.c.h.b16 %v306
    %v1065 = vunpack.c.l.b16 %v307
    %v1066 = vunpack.c.h.b16 %v307
    %v1067 = vunpack.c.l.b16 %v308
    %v1068 = vunpack.c.h.b16 %v308
    %v1069 = vunpack.c.l.b16 %v309
    %v1070 = vunpack.c.h.b16 %v309
    %v1071 = vunpack.c.l.b16 %v310
    %v1072 = vunpack.c.h.b16 %v310
    %v1073 = vunpack.c.l.b16 %v311
    %v1074 = vunpack.c.h.b16 %v311
    %v1075 = vunpack.c.l.b16 %v312
    %v1076 = vunpack.c.h.b16 %v312
    %v1077 = vunpack.c.l.b16 %v313
    %v1078 = vunpack.c.h.b16 %v313
    %v1079 = vunpack.c.l.b16 %v314
    %v1080 = vunpack.c.h.b16 %v314
    %v1081 = vunpack.c.l.b16 %v315
    %v1082 = vunpack.c.h.b16 %v315
    %v1083 = vunpack.c.l.b16 %v316
    %v1084 = vunpack.c.h.b16 %v316
    %v1085 = vunpack.c.l.b16 %v317
    %v1086 = vunpack.c.h.b16 %v317
    %v1087 = vunpack.c.l.b16 %v318
    %v1088 = vunpack.c.h.b16 %v318
    %v1089 = vunpack.c.l.b16 %v319
    %v1090 = vunpack.c.h.b16 %v319
    %v1091 = vunpack.c.l.b16 %v320
    %v1092 = vunpack.c.h.b16 %v320
    %v1093 = vunpack.c.l.b16 %v321
    %v1094 = vunpack.c.h.b16 %v321
    %v1095 = vunpack.c.l.b16 %v322
    %v1096 = vunpack.c.h.b16 %v322
    %v1097 = vunpack.c.l.b16 %v323
    %v1098 = vunpack.c.h.b16 %v323
    %v1099 = vunpack.c.l.b16 %v324
    %v1100 = vunpack.c.h.b16 %v324
    %v1101 = vunpack.c.l.b16 %v325
    %v1102 = vunpack.c.h.b16 %v325
    %v1103 = vunpack.c.l.b16 %v326
    %v1104 = vunpack.c.h.b16 %v326
    %v1105 = vunpack.c.l.b16 %v327
    %v1106 = vunpack.c.h.b16 %v327
    %v1107 = vunpack.c.l.b16 %v328
    %v1108 = vunpack.c.h.b16 %v328
    %v1109 = vunpack.c.l.b16 %v329
    %v1110 = vunpack.c.h.b16 %v329
    %v1111 = vunpack.c.l.b16 %v330
    %v1112 = vunpack.c.h.b16 %v330
    %v1113 = vpack.c.b16 %v609, %v601
    %v1114 = vpack.c.b16 %v610, %v602
    %v1115 = vpack.c.b16 %v611, %v603
    %v1116 = vpack.c.b16 %v612, %v604
    %v1117 = vpack.c.b16 %v613, %v605
    %v1118 = vpack.c.b16 %v614, %v606
    %v1119 = vpack.c.b16 %v615, %v607
    %v1120 = vpack.c.b16 %v616, %v608
    %v1121 = vpack.c.b16 %v625, %v617
    %v1122 = vpack.c.b16 %v626, %v618
    %v1123 = vpack.c.b16 %v627, %v619
    %v1124 = vpack.c.b16 %v628, %v620
    %v1125 = vpack.c.b16 %v629, %v621
    %v1126 = vpack.c.b16 %v630, %v622
    %v1127 = vpack.c.b16 %v631, %v623
    %v1128 = vpack.c.b16 %v632, %v624
    %v1129 = vpack.c.b16 %v641, %v633
    %v1130 = vpack.c.b16 %v642, %v634
    %v1131 = vpack.c.b16 %v643, %v635
    %v1132 = vpack.c.b16 %v644, %v636
    %v1133 = vpack.c.b16 %v645, %v637
    %v1134 = vpack.c.b16 %v646, %v638
    %v1135 = vpack.c.b16 %v647, %v639
    %v1136 = vpack.c.b16 %v648, %v640
    %v1137 = vpack.c.b16 %v657, %v649
    %v1138 = vpack.c.b16 %v658, %v650
    %v1139 = vpack.c.b16 %v659, %v651
    %v1140 = vpack.c.b16 %v660, %v652
    %v1141 = vpack.c.b16 %v661, %v653
    %v1142 = vpack.c.b16 %v662, %v654
    %v1143 = vpack.c.b16 %v663, %v655
    %v1144 = vpack.c.b16 %v664, %v656
    %v1145 = vpack.c.b16 %v673, %v665
    %v1146 = vpack.c.b16 %v674, %v666
    %v1147 = vpack.c.b16 %v675, %v667
    %v1148 = vpack.c.b16 %v676, %v668
    %v1149 = vpack.c.b16 %v677, %v669
    %v1150 = vpack.c.b16 %v678, %v670
    %v1151 = vpack.c.b16 %v679, %v671
    %v1152 = vpack.c.b16 %v680, %v672
    %v1153 = vpack.c.b16 %v689, %v681
    %v1154 = vpack.c.b16 %v690, %v682
    %v1155 = vpack.c.b16 %v691, %v683
    %v1156 = vpack.c.b16 %v692, %v684
    %v1157 = vpack.c.b16 %v693, %v685
    %v1158 = vpack.c.b16 %v694, %v686
    %v1159 = vpack.c.b16 %v695, %v687
    %v1160 = vpack.c.b16 %v696, %v688
    %v1161 = vpack.c.b16 %v705, %v697
    %v1162 = vpack.c.b16 %v706, %v698
    %v1163 = vpack.c.b16 %v707, %v699
    %v1164 = vpack.c.b16 %v708, %v700
    %v1165 = vpack.c.b16 %v709, %v701
    %v1166 = vpack.c.b16 %v710, %v702
    %v1167 = vpack.c.b16 %v711, %v703
    %v1168 = vpack.c.b16 %v712, %v704
    %v1169 = vpack.c.b16 %v721, %v713
    %v1170 = vpack.c.b16 %v722, %v714
    %v1171 = vpack.c.b16 %v723, %v715
    %v1172 = vpack.c.b16 %v724, %v716
    %v1173 = vpack.c.b16 %v725, %v717
    %v1174 = vpack.c.b16 %v726, %v718
    %v1175 = vpack.c.b16 %v727, %v719
    %v1176 = vpack.c.b16 %v728, %v720
    %v1177 = vpack.c.b16 %v737, %v729
    %v1178 = vpack.c.b16 %v738, %v730
    %v1179 = vpack.c.b16 %v739, %v731
    %v1180 = vpack.c.b16 %v740, %v732
    %v1181 = vpack.c.b16 %v741, %v733
    %v1182 = vpack.c.b16 %v742, %v734
    %v1183 = vpack.c.b16 %v743, %v735
    %v1184 = vpack.c.b16 %v744, %v736
    %v1185 = vpack.c.b16 %v753, %v745
    %v1186 = vpack.c.b16 %v754, %v746
    %v1187 = vpack.c.b16 %v755, %v747
    %v1188 = vpack.c.b16 %v756, %v748
    %v1189 = vpack.c.b16 %v757, %v749
    %v1190 = vpack.c.b16 %v758, %v750
    %v1191 = vpack.c.b16 %v759, %v751
    %v1192 = vpack.c.b16 %v760, %v752
    %v1193 = vpack.c.b16 %v769, %v761
    %v1194 = vpack.c.b16 %v770, %v762
    %v1195 = vpack.c.b16 %v771, %v763
    %v1196 = vpack.c.b16 %v772, %v764
    %v1197 = vpack.c.b16 %v773, %v765
    %v1198 = vpack.c.b16 %v774, %v766
    %v1199 = vpack.c.b16 %v775, %v767
    %v1200 = vpack.c.b16 %v776, %v768
    %v1201 = vpack.c.b16 %v785, %v777
    %v1202 = vpack.c.b16 %v786, %v778
    %v1203 = vpack.c.b16 %v787, %v779
    %v1204 = vpack.c.b16 %v788, %v780
    %v1205 = vpack.c.b16 %v789, %v781
    %v1206 = vpack.c.b16 %v790, %v782
    %v1207 = vpack.c.b16 %v791, %v783
    %v1208 = vpack.c.b16 %v792, %v784
    %v1209 = vpack.c.b16 %v801, %v793
    %v1210 = vpack.c.b16 %v802, %v794
    %v1211 = vpack.c.b16 %v803, %v795
    %v1212 = vpack.c.b16 %v804, %v796
    %v1213 = vpack.c.b16 %v805, %v797
    %v1214 = vpack.c.b16 %v806, %v798
    %v1215 = vpack.c.b16 %v807, %v799
    %v1216 = vpack.c.b16 %v808, %v800
    %v1217 = vpack.c.b16 %v817, %v809
    %v1218 = vpack.c.b16 %v818, %v810
    %v1219 = vpack.c.b16 %v819, %v811
    %v1220 = vpack.c.b16 %v820, %v812
    %v1221 = vpack.c.b16 %v821, %v813
    %v1222 = vpack.c.b16 %v822, %v814
    %v1223 = vpack.c.b16 %v823, %v815
    %v1224 = vpack.c.b16 %v824, %v816
    %v1225 = vpack.c.b16 %v833, %v825
    %v1226 = vpack.c.b16 %v834, %v826
    %v1227 = vpack.c.b16 %v835, %v827
    %v1228 = vpack.c.b16 %v836, %v828
    %v1229 = vpack.c.b16 %v837, %v829
    %v1230 = vpack.c.b16 %v838, %v830
    %v1231 = vpack.c.b16 %v839, %v831
    %v1232 = vpack.c.b16 %v840, %v832
    %v1233 = vpack.c.b16 %v849, %v841
    %v1234 = vpack.c.b16 %v850, %v842
    %v1235 = vpack.c.b16 %v851, %v843
    %v1236 = vpack.c.b16 %v852, %v844
    %v1237 = vpack.c.b16 %v853, %v845
    %v1238 = vpack.c.b16 %v854, %v846
    %v1239 = vpack.c.b16 %v855, %v847
    %v1240 = vpack.c.b16 %v856, %v848
    %v1241 = vpack.c.b16 %v865, %v857
    %v1242 = vpack.c.b16 %v866, %v858
    %v1243 = vpack.c.b16 %v867, %v859
    %v1244 = vpack.c.b16 %v868, %v860
    %v1245 = vpack.c.b16 %v869, %v861
    %v1246 = vpack.c.b16 %v870, %v862
    %v1247 = vpack.c.b16 %v871, %v863
    %v1248 = vpack.c.b16 %v872, %v864
    %v1249 = vpack.c.b16 %v881, %v873
    %v1250 = vpack.c.b16 %v882, %v874
    %v1251 = vpack.c.b16 %v883, %v875
    %v1252 = vpack.c.b16 %v884, %v876
    %v1253 = vpack.c.b16 %v885, %v877
    %v1254 = vpack.c.b16 %v886, %v878
    %v1255 = vpack.c.b16 %v887, %v879
    %v1256 = vpack.c.b16 %v888, %v880
    %v1257 = vpack.c.b16 %v897, %v889
    %v1258 = vpack.c.b16 %v898, %v890
    %v1259 = vpack.c.b16 %v899, %v891
    %v1260 = vpack.c.b16 %v900, %v892
    %v1261 = vpack.c.b16 %v901, %v893
    %v1262 = vpack.c.b16 %v902, %v894
    %v1263 = vpack.c.b16 %v903, %v895
    %v1264 = vpack.c.b16 %v904, %v896
    %v1265 = vpack.c.b16 %v913, %v905
    %v1266 = vpack.c.b16 %v914, %v906
    %v1267 = vpack.c.b16 %v915, %v907
    %v1268 = vpack.c.b16 %v916, %v908
    %v1269 = vpack.c.b16 %v917, %v909
    %v1270 = vpack.c.b16 %v918, %v910
    %v1271 = vpack.c.b16 %v919, %v911
    %v1272 = vpack.c.b16 %v920, %v912
    %v1273 = vpack.c.b16 %v929, %v921
    %v1274 = vpack.c.b16 %v930, %v922
    %v1275 = vpack.c.b16 %v931, %v923
    %v1276 = vpack.c.b16 %v932, %v924
    %v1277 = vpack.c.b16 %v933, %v925
    %v1278 = vpack.c.b16 %v934, %v926
    %v1279 = vpack.c.b16 %v935, %v927
    %v1280 = vpack.c.b16 %v936, %v928
    %v1281 = vpack.c.b16 %v945, %v937
    %v1282 = vpack.c.b16 %v946, %v938
    %v1283 = vpack.c.b16 %v947, %v939
    %v1284 = vpack.c.b16 %v948, %v940
    %v1285 = vpack.c.b16 %v949, %v941
    %v1286 = vpack.c.b16 %v950, %v942
    %v1287 = vpack.c.b16 %v951, %v943
    %v1288 = vpack.c.b16 %v952, %v944
    %v1289 = vpack.c.b16 %v961, %v953
    %v1290 = vpack.c.b16 %v962, %v954
    %v1291 = vpack.c.b16 %v963, %v955
    %v1292 = vpack.c.b16 %v964, %v956
    %v1293 = vpack.c.b16 %v965, %v957
    %v1294 = vpack.c.b16 %v966, %v958
    %v1295 = vpack.c.b16 %v967, %v959
    %v1296 = vpack.c.b16 %v968, %v960
    %v1297 = vpack.c.b16 %v977, %v969
    %v1298 = vpack.c.b16 %v978, %v970
    %v1299 = vpack.c.b16 %v979, %v971
    %v1300 = vpack.c.b16 %v980, %v972
    %v1301 = vpack.c.b16 %v981, %v973
    %v1302 = vpack.c.b16 %v982, %v974
    %v1303 = vpack.c.b16 %v983, %v975
    %v1304 = vpack.c.b16 %v984, %v976
    %v1305 = vpack.c.b16 %v993, %v985
    %v1306 = vpack.c.b16 %v994, %v986
    %v1307 = vpack.c.b16 %v995, %v987
    %v1308 = vpack.c.b16 %v996, %v988
    %v1309 = vpack.c.b16 %v997, %v989
    %v1310 = vpack.c.b16 %v998, %v990
    %v1311 = vpack.c.b16 %v999, %v991
    %v1312 = vpack.c.b16 %v1000, %v992
    %v1313 = vpack.c.b16 %v1009, %v1001
    %v1314 = vpack.c.b16 %v1010, %v1002
    %v1315 = vpack.c.b16 %v1011, %v1003
    %v1316 = vpack.c.b16 %v1012, %v1004
    %v1317 = vpack.c.b16 %v1013, %v1005
    %v1318 = vpack.c.b16 %v1014, %v1006
    %v1319 = vpack.c.b16 %v1015, %v1007
    %v1320 = vpack.c.b16 %v1016, %v1008
    %v1321 = vpack.c.b16 %v1025, %v1017
    %v1322 = vpack.c.b16 %v1026, %v1018
    %v1323 = vpack.c.b16 %v1027, %v1019
    %v1324 = vpack.c.b16 %v1028, %v1020
    %v1325 = vpack.c.b16 %v1029, %v1021
    %v1326 = vpack.c.b16 %v1030, %v1022
    %v1327 = vpack.c.b16 %v1031, %v1023
    %v1328 = vpack.c.b16 %v1032, %v1024
    %v1329 = vpack.c.b16 %v1041, %v1033
    %v1330 = vpack.c.b16 %v1042, %v1034
    %v1331 = vpack.c.b16 %v1043, %v1035
    %v1332 = vpack.c.b16 %v1044, %v1036
    %v1333 = vpack.c.b16 %v1045, %v1037
    %v1334 = vpack.c.b16 %v1046, %v1038
    %v1335 = vpack.c.b16 %v1047, %v1039
    %v1336 = vpack.c.b16 %v1048, %v1040
    %v1337 = vpack.c.b16 %v1057, %v1049
    %v1338 = vpack.c.b16 %v1058, %v1050
    %v1339 = vpack.c.b16 %v1059, %v1051
    %v1340 = vpack.c.b16 %v1060, %v1052
    %v1341 = vpack.c.b16 %v1061, %v1053
    %v1342 = vpack.c.b16 %v1062, %v1054
    %v1343 = vpack.c.b16 %v1063, %v1055
    %v1344 = vpack.c.b16 %v1064, %v1056
    %v1345 = vpack.c.b16 %v1073, %v1065
    %v1346 = vpack.c.b16 %v1074, %v1066
    %v1347 = vpack.c.b16 %v1075, %v1067
    %v1348 = vpack.c.b16 %v1076, %v1068
    %v1349 = vpack.c.b16 %v1077, %v1069
    %v1350 = vpack.c.b16 %v1078, %v1070
    %v1351 = vpack.c.b16 %v1079, %v1071
    %v1352 = vpack.c.b16 %v1080, %v1072
    %v1353 = vpack.c.b16 %v1089, %v1081
    %v1354 = vpack.c.b16 %v1090, %v1082
    %v1355 = vpack.c.b16 %v1091, %v1083
    %v1356 = vpack.c.b16 %v1092, %v1084
    %v1357 = vpack.c.b16 %v1093, %v1085
    %v1358 = vpack.c.b16 %v1094, %v1086
    %v1359 = vpack.c.b16 %v1095, %v1087
    %v1360 = vpack.c.b16 %v1096, %v1088
    %v1361 = vpack.c.b16 %v1105, %v1097
    %v1362 = vpack.c.b16 %v1106, %v1098
    %v1363 = vpack.c.b16 %v1107, %v1099
    %v1364 = vpack.c.b16 %v1108, %v1100
    %v1365 = vpack.c.b16 %v1109, %v1101
    %v1366 = vpack.c.b16 %v1110, %v1102
    %v1367 = vpack.c.b16 %v1111, %v1103
    %v1368 = vpack.c.b16 %v1112, %v1104
    %1625 = vmatprep.subr.bf16.mxu0 %v1114
    %1626 = vmatpush1.bf16.msra.mxu0 %v1113
    %1627 = vmatprep.subr.bf16.mxu0 %v1122
    %1628 = vmatpush1.bf16.msra.mxu0 %v1121
    %1629 = vmatprep.subr.bf16.mxu0 %v1130
    %1630 = vmatpush1.bf16.msra.mxu0 %v1129
    %1631 = vmatprep.subr.bf16.mxu0 %v1138
    %1632 = vmatpush1.bf16.msra.mxu0 %v1137
    %1633 = vmatprep.subr.bf16.mxu0 %v1146
    %1634 = vmatpush1.bf16.msra.mxu0 %v1145
    %1635 = vmatprep.subr.bf16.mxu0 %v1154
    %1636 = vmatpush1.bf16.msra.mxu0 %v1153
    %1637 = vmatprep.subr.bf16.mxu0 %v1162
    %1638 = vmatpush1.bf16.msra.mxu0 %v1161
    %1639 = vmatprep.subr.bf16.mxu0 %v1170
    %1640 = vmatpush1.bf16.msra.mxu0 %v1169
    %1641 = vmatprep.subr.bf16.mxu0 %v1178
    %1642 = vmatpush1.bf16.msra.mxu0 %v1177
    %1643 = vmatprep.subr.bf16.mxu0 %v1186
    %1644 = vmatpush1.bf16.msra.mxu0 %v1185
    %1645 = vmatprep.subr.bf16.mxu0 %v1194
    %1646 = vmatpush1.bf16.msra.mxu0 %v1193
    %1647 = vmatprep.subr.bf16.mxu0 %v1202
    %1648 = vmatpush1.bf16.msra.mxu0 %v1201
    %1649 = vmatprep.subr.bf16.mxu0 %v1210
    %1650 = vmatpush1.bf16.msra.mxu0 %v1209
    %1651 = vmatprep.subr.bf16.mxu0 %v1218
    %1652 = vmatpush1.bf16.msra.mxu0 %v1217
    %1653 = vmatprep.subr.bf16.mxu0 %v1226
    %1654 = vmatpush1.bf16.msra.mxu0 %v1225
    %1655 = vmatprep.subr.bf16.mxu0 %v1234
    %1656 = vmatpush1.bf16.msra.mxu0 %v1233
    %1657 = vmatprep.mubr.bf16.mxu0 %v338
    %1658 = vmatmul.mubr.bf16.gmra.mrb[0].mxu0 %v337
    %v1659 = vpop.f32.mrb[0].mxu0
    %v1660 = vadd.f32 0.0, %v1659
    %v1661 = vpop.f32.mrb[0].mxu0
    %v1662 = vadd.f32 0.0, %v1661
    %v1663 = vpop.f32.mrb[0].mxu0
    %v1664 = vpop.f32.mrb[0].mxu0
    %1665 = vdwg.mxu0
    %1666 = vmatprep.subr.bf16.mxu0 %v1242
    %1667 = vmatpush1.bf16.msra.mxu0 %v1241
    %1668 = vmatprep.subr.bf16.mxu0 %v1250
    %1669 = vmatpush1.bf16.msra.mxu0 %v1249
    %1670 = vmatprep.subr.bf16.mxu0 %v1258
    %1671 = vmatpush1.bf16.msra.mxu0 %v1257
    %1672 = vmatprep.subr.bf16.mxu0 %v1266
    %1673 = vmatpush1.bf16.msra.mxu0 %v1265
    %1674 = vmatprep.subr.bf16.mxu0 %v1274
    %1675 = vmatpush1.bf16.msra.mxu0 %v1273
    %1676 = vmatprep.subr.bf16.mxu0 %v1282
    %1677 = vmatpush1.bf16.msra.mxu0 %v1281
    %1678 = vmatprep.subr.bf16.mxu0 %v1290
    %1679 = vmatpush1.bf16.msra.mxu0 %v1289
    %1680 = vmatprep.subr.bf16.mxu0 %v1298
    %1681 = vmatpush1.bf16.msra.mxu0 %v1297
    %1682 = vmatprep.subr.bf16.mxu0 %v1306
    %1683 = vmatpush1.bf16.msra.mxu0 %v1305
    %1684 = vmatprep.subr.bf16.mxu0 %v1314
    %1685 = vmatpush1.bf16.msra.mxu0 %v1313
    %1686 = vmatprep.subr.bf16.mxu0 %v1322
    %1687 = vmatpush1.bf16.msra.mxu0 %v1321
    %1688 = vmatprep.subr.bf16.mxu0 %v1330
    %1689 = vmatpush1.bf16.msra.mxu0 %v1329
    %1690 = vmatprep.subr.bf16.mxu0 %v1338
    %1691 = vmatpush1.bf16.msra.mxu0 %v1337
    %1692 = vmatprep.subr.bf16.mxu0 %v1346
    %1693 = vmatpush1.bf16.msra.mxu0 %v1345
    %1694 = vmatprep.subr.bf16.mxu0 %v1354
    %1695 = vmatpush1.bf16.msra.mxu0 %v1353
    %1696 = vmatprep.subr.bf16.mxu0 %v1362
    %1697 = vmatpush1.bf16.msra.mxu0 %v1361
    %1698 = vmatprep.mubr.bf16.mxu0 %v340
    %1699 = vmatmul.mubr.bf16.gmra.mrb[0].mxu0 %v339
    %v1700 = vpop.f32.mrb[0].mxu0
    %v1701 = vadd.f32 %v1660, %v1700
    %v1702 = vpop.f32.mrb[0].mxu0
    %v1703 = vadd.f32 %v1662, %v1702
    %v1704 = vpop.f32.mrb[0].mxu0
    %v1705 = vpop.f32.mrb[0].mxu0
    %1706 = vdwg.mxu0
    %1707 = vmatprep.subr.bf16.mxu0 %v1116
    %1708 = vmatpush1.bf16.msra.mxu0 %v1115
    %1709 = vmatprep.subr.bf16.mxu0 %v1124
    %1710 = vmatpush1.bf16.msra.mxu0 %v1123
    %1711 = vmatprep.subr.bf16.mxu0 %v1132
    %1712 = vmatpush1.bf16.msra.mxu0 %v1131
    %1713 = vmatprep.subr.bf16.mxu0 %v1140
    %1714 = vmatpush1.bf16.msra.mxu0 %v1139
    %1715 = vmatprep.subr.bf16.mxu0 %v1148
    %1716 = vmatpush1.bf16.msra.mxu0 %v1147
    %1717 = vmatprep.subr.bf16.mxu0 %v1156
    %1718 = vmatpush1.bf16.msra.mxu0 %v1155
    %1719 = vmatprep.subr.bf16.mxu0 %v1164
    %1720 = vmatpush1.bf16.msra.mxu0 %v1163
    %1721 = vmatprep.subr.bf16.mxu0 %v1172
    %1722 = vmatpush1.bf16.msra.mxu0 %v1171
    %1723 = vmatprep.subr.bf16.mxu0 %v1180
    %1724 = vmatpush1.bf16.msra.mxu0 %v1179
    %1725 = vmatprep.subr.bf16.mxu0 %v1188
    %1726 = vmatpush1.bf16.msra.mxu0 %v1187
    %1727 = vmatprep.subr.bf16.mxu0 %v1196
    %1728 = vmatpush1.bf16.msra.mxu0 %v1195
    %1729 = vmatprep.subr.bf16.mxu0 %v1204
    %1730 = vmatpush1.bf16.msra.mxu0 %v1203
    %1731 = vmatprep.subr.bf16.mxu0 %v1212
    %1732 = vmatpush1.bf16.msra.mxu0 %v1211
    %1733 = vmatprep.subr.bf16.mxu0 %v1220
    %1734 = vmatpush1.bf16.msra.mxu0 %v1219
    %1735 = vmatprep.subr.bf16.mxu0 %v1228
    %1736 = vmatpush1.bf16.msra.mxu0 %v1227
    %1737 = vmatprep.subr.bf16.mxu0 %v1236
    %1738 = vmatpush1.bf16.msra.mxu0 %v1235
    %1739 = vmatprep.mubr.bf16.mxu0 %v338
    %1740 = vmatmul.mubr.bf16.gmra.mrb[0].mxu0 %v337
    %v1741 = vpop.f32.mrb[0].mxu0
    %v1742 = vadd.f32 0.0, %v1741
    %v1743 = vpop.f32.mrb[0].mxu0
    %v1744 = vadd.f32 0.0, %v1743
    %v1745 = vpop.f32.mrb[0].mxu0
    %v1746 = vpop.f32.mrb[0].mxu0
    %1747 = vdwg.mxu0
    %1748 = vmatprep.subr.bf16.mxu0 %v1244
    %1749 = vmatpush1.bf16.msra.mxu0 %v1243
    %1750 = vmatprep.subr.bf16.mxu0 %v1252
    %1751 = vmatpush1.bf16.msra.mxu0 %v1251
    %1752 = vmatprep.subr.bf16.mxu0 %v1260
    %1753 = vmatpush1.bf16.msra.mxu0 %v1259
    %1754 = vmatprep.subr.bf16.mxu0 %v1268
    %1755 = vmatpush1.bf16.msra.mxu0 %v1267
    %1756 = vmatprep.subr.bf16.mxu0 %v1276
    %1757 = vmatpush1.bf16.msra.mxu0 %v1275
    %1758 = vmatprep.subr.bf16.mxu0 %v1284
    %1759 = vmatpush1.bf16.msra.mxu0 %v1283
    %1760 = vmatprep.subr.bf16.mxu0 %v1292
    %1761 = vmatpush1.bf16.msra.mxu0 %v1291
    %1762 = vmatprep.subr.bf16.mxu0 %v1300
    %1763 = vmatpush1.bf16.msra.mxu0 %v1299
    %1764 = vmatprep.subr.bf16.mxu0 %v1308
    %1765 = vmatpush1.bf16.msra.mxu0 %v1307
    %1766 = vmatprep.subr.bf16.mxu0 %v1316
    %1767 = vmatpush1.bf16.msra.mxu0 %v1315
    %1768 = vmatprep.subr.bf16.mxu0 %v1324
    %1769 = vmatpush1.bf16.msra.mxu0 %v1323
    %1770 = vmatprep.subr.bf16.mxu0 %v1332
    %1771 = vmatpush1.bf16.msra.mxu0 %v1331
    %1772 = vmatprep.subr.bf16.mxu0 %v1340
    %1773 = vmatpush1.bf16.msra.mxu0 %v1339
    %1774 = vmatprep.subr.bf16.mxu0 %v1348
    %1775 = vmatpush1.bf16.msra.mxu0 %v1347
    %1776 = vmatprep.subr.bf16.mxu0 %v1356
    %1777 = vmatpush1.bf16.msra.mxu0 %v1355
    %1778 = vmatprep.subr.bf16.mxu0 %v1364
    %1779 = vmatpush1.bf16.msra.mxu0 %v1363
    %1780 = vmatprep.mubr.bf16.mxu0 %v340
    %1781 = vmatmul.mubr.bf16.gmra.mrb[0].mxu0 %v339
    %v1782 = vpop.f32.mrb[0].mxu0
    %v1783 = vadd.f32 %v1742, %v1782
    %v1784 = vpop.f32.mrb[0].mxu0
    %v1785 = vadd.f32 %v1744, %v1784
    %v1786 = vpop.f32.mrb[0].mxu0
    %v1787 = vpop.f32.mrb[0].mxu0
    %1788 = vdwg.mxu0
    %1789 = vmatprep.subr.bf16.mxu0 %v1118
    %1790 = vmatpush1.bf16.msra.mxu0 %v1117
    %1791 = vmatprep.subr.bf16.mxu0 %v1126
    %1792 = vmatpush1.bf16.msra.mxu0 %v1125
    %1793 = vmatprep.subr.bf16.mxu0 %v1134
    %1794 = vmatpush1.bf16.msra.mxu0 %v1133
    %1795 = vmatprep.subr.bf16.mxu0 %v1142
    %1796 = vmatpush1.bf16.msra.mxu0 %v1141
    %1797 = vmatprep.subr.bf16.mxu0 %v1150
    %1798 = vmatpush1.bf16.msra.mxu0 %v1149
    %1799 = vmatprep.subr.bf16.mxu0 %v1158
    %1800 = vmatpush1.bf16.msra.mxu0 %v1157
    %1801 = vmatprep.subr.bf16.mxu0 %v1166
    %1802 = vmatpush1.bf16.msra.mxu0 %v1165
    %1803 = vmatprep.subr.bf16.mxu0 %v1174
    %1804 = vmatpush1.bf16.msra.mxu0 %v1173
    %1805 = vmatprep.subr.bf16.mxu0 %v1182
    %1806 = vmatpush1.bf16.msra.mxu0 %v1181
    %1807 = vmatprep.subr.bf16.mxu0 %v1190
    %1808 = vmatpush1.bf16.msra.mxu0 %v1189
    %1809 = vmatprep.subr.bf16.mxu0 %v1198
    %1810 = vmatpush1.bf16.msra.mxu0 %v1197
    %1811 = vmatprep.subr.bf16.mxu0 %v1206
    %1812 = vmatpush1.bf16.msra.mxu0 %v1205
    %1813 = vmatprep.subr.bf16.mxu0 %v1214
    %1814 = vmatpush1.bf16.msra.mxu0 %v1213
    %1815 = vmatprep.subr.bf16.mxu0 %v1222
    %1816 = vmatpush1.bf16.msra.mxu0 %v1221
    %1817 = vmatprep.subr.bf16.mxu0 %v1230
    %1818 = vmatpush1.bf16.msra.mxu0 %v1229
    %1819 = vmatprep.subr.bf16.mxu0 %v1238
    %1820 = vmatpush1.bf16.msra.mxu0 %v1237
    %1821 = vmatprep.mubr.bf16.mxu0 %v338
    %1822 = vmatmul.mubr.bf16.gmra.mrb[0].mxu0 %v337
    %v1823 = vpop.f32.mrb[0].mxu0
    %v1824 = vadd.f32 0.0, %v1823
    %v1825 = vpop.f32.mrb[0].mxu0
    %v1826 = vadd.f32 0.0, %v1825
    %v1827 = vpop.f32.mrb[0].mxu0
    %v1828 = vpop.f32.mrb[0].mxu0
    %1829 = vdwg.mxu0
    %1830 = vmatprep.subr.bf16.mxu0 %v1246
    %1831 = vmatpush1.bf16.msra.mxu0 %v1245
    %1832 = vmatprep.subr.bf16.mxu0 %v1254
    %1833 = vmatpush1.bf16.msra.mxu0 %v1253
    %1834 = vmatprep.subr.bf16.mxu0 %v1262
    %1835 = vmatpush1.bf16.msra.mxu0 %v1261
    %1836 = vmatprep.subr.bf16.mxu0 %v1270
    %1837 = vmatpush1.bf16.msra.mxu0 %v1269
    %1838 = vmatprep.subr.bf16.mxu0 %v1278
    %1839 = vmatpush1.bf16.msra.mxu0 %v1277
    %1840 = vmatprep.subr.bf16.mxu0 %v1286
    %1841 = vmatpush1.bf16.msra.mxu0 %v1285
    %1842 = vmatprep.subr.bf16.mxu0 %v1294
    %1843 = vmatpush1.bf16.msra.mxu0 %v1293
    %1844 = vmatprep.subr.bf16.mxu0 %v1302
    %1845 = vmatpush1.bf16.msra.mxu0 %v1301
    %1846 = vmatprep.subr.bf16.mxu0 %v1310
    %1847 = vmatpush1.bf16.msra.mxu0 %v1309
    %1848 = vmatprep.subr.bf16.mxu0 %v1318
    %1849 = vmatpush1.bf16.msra.mxu0 %v1317
    %1850 = vmatprep.subr.bf16.mxu0 %v1326
    %1851 = vmatpush1.bf16.msra.mxu0 %v1325
    %1852 = vmatprep.subr.bf16.mxu0 %v1334
    %1853 = vmatpush1.bf16.msra.mxu0 %v1333
    %1854 = vmatprep.subr.bf16.mxu0 %v1342
    %1855 = vmatpush1.bf16.msra.mxu0 %v1341
    %1856 = vmatprep.subr.bf16.mxu0 %v1350
    %1857 = vmatpush1.bf16.msra.mxu0 %v1349
    %1858 = vmatprep.subr.bf16.mxu0 %v1358
    %1859 = vmatpush1.bf16.msra.mxu0 %v1357
    %1860 = vmatprep.subr.bf16.mxu0 %v1366
    %1861 = vmatpush1.bf16.msra.mxu0 %v1365
    %1862 = vmatprep.mubr.bf16.mxu0 %v340
    %1863 = vmatmul.mubr.bf16.gmra.mrb[0].mxu0 %v339
    %v1864 = vpop.f32.mrb[0].mxu0
    %v1865 = vadd.f32 %v1824, %v1864
    %v1866 = vpop.f32.mrb[0].mxu0
    %v1867 = vadd.f32 %v1826, %v1866
    %v1868 = vpop.f32.mrb[0].mxu0
    %v1869 = vpop.f32.mrb[0].mxu0
    %1870 = vdwg.mxu0
    %1871 = vmatprep.subr.bf16.mxu0 %v1120
    %1872 = vmatpush1.bf16.msra.mxu0 %v1119
    %1873 = vmatprep.subr.bf16.mxu0 %v1128
    %1874 = vmatpush1.bf16.msra.mxu0 %v1127
    %1875 = vmatprep.subr.bf16.mxu0 %v1136
    %1876 = vmatpush1.bf16.msra.mxu0 %v1135
    %1877 = vmatprep.subr.bf16.mxu0 %v1144
    %1878 = vmatpush1.bf16.msra.mxu0 %v1143
    %1879 = vmatprep.subr.bf16.mxu0 %v1152
    %1880 = vmatpush1.bf16.msra.mxu0 %v1151
    %1881 = vmatprep.subr.bf16.mxu0 %v1160
    %1882 = vmatpush1.bf16.msra.mxu0 %v1159
    %1883 = vmatprep.subr.bf16.mxu0 %v1168
    %1884 = vmatpush1.bf16.msra.mxu0 %v1167
    %1885 = vmatprep.subr.bf16.mxu0 %v1176
    %1886 = vmatpush1.bf16.msra.mxu0 %v1175
    %1887 = vmatprep.subr.bf16.mxu0 %v1184
    %1888 = vmatpush1.bf16.msra.mxu0 %v1183
    %1889 = vmatprep.subr.bf16.mxu0 %v1192
    %1890 = vmatpush1.bf16.msra.mxu0 %v1191
    %1891 = vmatprep.subr.bf16.mxu0 %v1200
    %1892 = vmatpush1.bf16.msra.mxu0 %v1199
    %1893 = vmatprep.subr.bf16.mxu0 %v1208
    %1894 = vmatpush1.bf16.msra.mxu0 %v1207
    %1895 = vmatprep.subr.bf16.mxu0 %v1216
    %1896 = vmatpush1.bf16.msra.mxu0 %v1215
    %1897 = vmatprep.subr.bf16.mxu0 %v1224
    %1898 = vmatpush1.bf16.msra.mxu0 %v1223
    %1899 = vmatprep.subr.bf16.mxu0 %v1232
    %1900 = vmatpush1.bf16.msra.mxu0 %v1231
    %1901 = vmatprep.subr.bf16.mxu0 %v1240
    %1902 = vmatpush1.bf16.msra.mxu0 %v1239
    %1903 = vmatprep.mubr.bf16.mxu0 %v338
    %1904 = vmatmul.mubr.bf16.gmra.mrb[0].mxu0 %v337
    %v1905 = vpop.f32.mrb[0].mxu0
    %v1906 = vadd.f32 0.0, %v1905
    %v1907 = vpop.f32.mrb[0].mxu0
    %v1908 = vadd.f32 0.0, %v1907
    %v1909 = vpop.f32.mrb[0].mxu0
    %v1910 = vpop.f32.mrb[0].mxu0
    %1911 = vdwg.mxu0
    %1912 = vmatprep.subr.bf16.mxu0 %v1248
    %1913 = vmatpush1.bf16.msra.mxu0 %v1247
    %1914 = vmatprep.subr.bf16.mxu0 %v1256
    %1915 = vmatpush1.bf16.msra.mxu0 %v1255
    %1916 = vmatprep.subr.bf16.mxu0 %v1264
    %1917 = vmatpush1.bf16.msra.mxu0 %v1263
    %1918 = vmatprep.subr.bf16.mxu0 %v1272
    %1919 = vmatpush1.bf16.msra.mxu0 %v1271
    %1920 = vmatprep.subr.bf16.mxu0 %v1280
    %1921 = vmatpush1.bf16.msra.mxu0 %v1279
    %1922 = vmatprep.subr.bf16.mxu0 %v1288
    %1923 = vmatpush1.bf16.msra.mxu0 %v1287
    %1924 = vmatprep.subr.bf16.mxu0 %v1296
    %1925 = vmatpush1.bf16.msra.mxu0 %v1295
    %1926 = vmatprep.subr.bf16.mxu0 %v1304
    %1927 = vmatpush1.bf16.msra.mxu0 %v1303
    %1928 = vmatprep.subr.bf16.mxu0 %v1312
    %1929 = vmatpush1.bf16.msra.mxu0 %v1311
    %1930 = vmatprep.subr.bf16.mxu0 %v1320
    %1931 = vmatpush1.bf16.msra.mxu0 %v1319
    %1932 = vmatprep.subr.bf16.mxu0 %v1328
    %1933 = vmatpush1.bf16.msra.mxu0 %v1327
    %1934 = vmatprep.subr.bf16.mxu0 %v1336
    %1935 = vmatpush1.bf16.msra.mxu0 %v1335
    %1936 = vmatprep.subr.bf16.mxu0 %v1344
    %1937 = vmatpush1.bf16.msra.mxu0 %v1343
    %1938 = vmatprep.subr.bf16.mxu0 %v1352
    %1939 = vmatpush1.bf16.msra.mxu0 %v1351
    %1940 = vmatprep.subr.bf16.mxu0 %v1360
    %1941 = vmatpush1.bf16.msra.mxu0 %v1359
    %1942 = vmatprep.subr.bf16.mxu0 %v1368
    %1943 = vmatpush1.bf16.msra.mxu0 %v1367
    %1944 = vmatprep.mubr.bf16.mxu0 %v340
    %1945 = vmatmul.mubr.bf16.gmra.mrb[0].mxu0 %v339
    %v1946 = vpop.f32.mrb[0].mxu0
    %v1947 = vadd.f32 %v1906, %v1946
    %v1948 = vpop.f32.mrb[0].mxu0
    %v1949 = vadd.f32 %v1908, %v1948
    %v1950 = vpop.f32.mrb[0].mxu0
    %v1951 = vpop.f32.mrb[0].mxu0
    %1952 = vdwg.mxu0
    %v1953 = vld [vmem:[%s3] sm:$0xff]
    %v1954 = vld [vmem:[#allocation8] sm:$0xff]
    %v1955 = vmul.f32 %v1701, %v1953
    %1956 = vrot.lane.b32.xlu0 %v1701, 64
    %v1957 = vpop.permute.xlu0 %1956
    %v1958 = vmul.f32 %v1957, %v1954
    %v1959 = vadd.f32 %v1955, %v1958
    %v1960 = vmul.f32 %v1703, %v1953
    %1961 = vrot.lane.b32.xlu0 %v1703, 64
    %v1962 = vpop.permute.xlu0 %1961
    %v1963 = vmul.f32 %v1962, %v1954
    %v1964 = vadd.f32 %v1960, %v1963
    %v1965 = vmul.f32 %v1783, %v1953
    %1966 = vrot.lane.b32.xlu0 %v1783, 64
    %v1967 = vpop.permute.xlu0 %1966
    %v1968 = vmul.f32 %v1967, %v1954
    %v1969 = vadd.f32 %v1965, %v1968
    %v1970 = vmul.f32 %v1785, %v1953
    %1971 = vrot.lane.b32.xlu0 %v1785, 64
    %v1972 = vpop.permute.xlu0 %1971
    %v1973 = vmul.f32 %v1972, %v1954
    %v1974 = vadd.f32 %v1970, %v1973
    %v1975 = vmul.f32 %v1865, %v1953
    %1976 = vrot.lane.b32.xlu0 %v1865, 64
    %v1977 = vpop.permute.xlu0 %1976
    %v1978 = vmul.f32 %v1977, %v1954
    %v1979 = vadd.f32 %v1975, %v1978
    %v1980 = vmul.f32 %v1867, %v1953
    %1981 = vrot.lane.b32.xlu0 %v1867, 64
    %v1982 = vpop.permute.xlu0 %1981
    %v1983 = vmul.f32 %v1982, %v1954
    %v1984 = vadd.f32 %v1980, %v1983
    %v1985 = vpack.c.bf16 %v1959, %v1959
    %v1986 = vpack.c.bf16 %v1964, %v1964
    %v1987 = vpack.c.bf16 %v1969, %v1969
    %v1988 = vpack.c.bf16 %v1974, %v1974
    %v1989 = vpack.c.bf16 %v1979, %v1979
    %v1990 = vpack.c.bf16 %v1984, %v1984
    %1991 = vmatprep.subr.bf16.mxu0 0
    %1992 = vmatpush1.bf16.xpose.msra.mxu0 %v1989
    %1993 = vmatprep.subr.bf16.mxu0 0
    %1994 = vmatpush1.bf16.xpose.msra.mxu0 0
    %1995 = vmatprep.subr.bf16.mxu0 0
    %1996 = vmatpush1.bf16.xpose.msra.mxu0 0
    %1997 = vmatprep.subr.bf16.mxu0 0
    %1998 = vmatpush1.bf16.xpose.msra.mxu0 0
    %1999 = vmatprep.subr.bf16.mxu0 0
    %2000 = vmatpush1.bf16.xpose.msra.mxu0 0
    %2001 = vmatprep.subr.bf16.mxu0 0
    %2002 = vmatpush1.bf16.xpose.msra.mxu0 0
    %2003 = vmatprep.subr.bf16.mxu0 0
    %2004 = vmatpush1.bf16.xpose.msra.mxu0 0
    %2005 = vmatprep.subr.bf16.mxu0 0
    %2006 = vmatpush1.bf16.xpose.msra.mxu0 0
    %2007 = vmatprep.subr.bf16.mxu0 0
    %2008 = vmatpush1.bf16.xpose.msra.mxu0 0
    %2009 = vmatprep.subr.bf16.mxu0 0
    %2010 = vmatpush1.bf16.xpose.msra.mxu0 0
    %2011 = vmatprep.subr.bf16.mxu0 0
    %2012 = vmatpush1.bf16.xpose.msra.mxu0 0
    %2013 = vmatprep.subr.bf16.mxu0 0
    %2014 = vmatpush1.bf16.xpose.msra.mxu0 0
    %2015 = vmatprep.subr.bf16.mxu0 0
    %2016 = vmatpush1.bf16.xpose.msra.mxu0 0
    %2017 = vmatprep.subr.bf16.mxu0 0
    %2018 = vmatpush1.bf16.xpose.msra.mxu0 0
    %2019 = vmatprep.subr.bf16.mxu0 0
    %2020 = vmatpush1.bf16.xpose.msra.mxu0 0
    %2021 = vmatprep.subr.bf16.mxu0 0
    %2022 = vmatpush1.bf16.xpose.msra.mxu0 0
    %2023 = vmatprep.mubr.bf16.mxu0 0
    %2024 = vmatmul.mubr.bf16.gmra.mrb[0].mxu0 %v1985
    %v2025 = vpop.f32.mrb[0].mxu0
    %v2026 = vadd.f32 0.0, %v2025
    %v2027 = vpop.f32.mrb[0].mxu0
    %v2028 = vpop.f32.mrb[0].mxu0
    %v2029 = vpop.f32.mrb[0].mxu0
    %2030 = vdwg.mxu0
    %2031 = vmatprep.subr.bf16.mxu0 0
    %2032 = vmatpush1.bf16.xpose.msra.mxu0 %v1989
    %2033 = vmatprep.subr.bf16.mxu0 0
    %2034 = vmatpush1.bf16.xpose.msra.mxu0 0
    %2035 = vmatprep.subr.bf16.mxu0 0
    %2036 = vmatpush1.bf16.xpose.msra.mxu0 0
    %2037 = vmatprep.subr.bf16.mxu0 0
    %2038 = vmatpush1.bf16.xpose.msra.mxu0 0
    %2039 = vmatprep.subr.bf16.mxu0 0
    %2040 = vmatpush1.bf16.xpose.msra.mxu0 0
    %2041 = vmatprep.subr.bf16.mxu0 0
    %2042 = vmatpush1.bf16.xpose.msra.mxu0 0
    %2043 = vmatprep.subr.bf16.mxu0 0
    %2044 = vmatpush1.bf16.xpose.msra.mxu0 0
    %2045 = vmatprep.subr.bf16.mxu0 0
    %2046 = vmatpush1.bf16.xpose.msra.mxu0 0
    %2047 = vmatprep.subr.bf16.mxu0 0
    %2048 = vmatpush1.bf16.xpose.msra.mxu0 0
    %2049 = vmatprep.subr.bf16.mxu0 0
    %2050 = vmatpush1.bf16.xpose.msra.mxu0 0
    %2051 = vmatprep.subr.bf16.mxu0 0
    %2052 = vmatpush1.bf16.xpose.msra.mxu0 0
    %2053 = vmatprep.subr.bf16.mxu0 0
    %2054 = vmatpush1.bf16.xpose.msra.mxu0 0
    %2055 = vmatprep.subr.bf16.mxu0 0
    %2056 = vmatpush1.bf16.xpose.msra.mxu0 0
    %2057 = vmatprep.subr.bf16.mxu0 0
    %2058 = vmatpush1.bf16.xpose.msra.mxu0 0
    %2059 = vmatprep.subr.bf16.mxu0 0
    %2060 = vmatpush1.bf16.xpose.msra.mxu0 0
    %2061 = vmatprep.subr.bf16.mxu0 0
    %2062 = vmatpush1.bf16.xpose.msra.mxu0 0
    %2063 = vmatprep.mubr.bf16.mxu0 0
    %2064 = vmatmul.mubr.bf16.gmra.mrb[0].mxu0 %v1986
    %v2065 = vpop.f32.mrb[0].mxu0
    %v2066 = vadd.f32 0.0, %v2065
    %v2067 = vpop.f32.mrb[0].mxu0
    %v2068 = vpop.f32.mrb[0].mxu0
    %v2069 = vpop.f32.mrb[0].mxu0
    %2070 = vdwg.mxu0
    %2071 = vmatprep.subr.bf16.mxu0 0
    %2072 = vmatpush1.bf16.xpose.msra.mxu0 %v1990
    %2073 = vmatprep.subr.bf16.mxu0 0
    %2074 = vmatpush1.bf16.xpose.msra.mxu0 0
    %2075 = vmatprep.subr.bf16.mxu0 0
    %2076 = vmatpush1.bf16.xpose.msra.mxu0 0
    %2077 = vmatprep.subr.bf16.mxu0 0
    %2078 = vmatpush1.bf16.xpose.msra.mxu0 0
    %2079 = vmatprep.subr.bf16.mxu0 0
    %2080 = vmatpush1.bf16.xpose.msra.mxu0 0
    %2081 = vmatprep.subr.bf16.mxu0 0
    %2082 = vmatpush1.bf16.xpose.msra.mxu0 0
    %2083 = vmatprep.subr.bf16.mxu0 0
    %2084 = vmatpush1.bf16.xpose.msra.mxu0 0
    %2085 = vmatprep.subr.bf16.mxu0 0
    %2086 = vmatpush1.bf16.xpose.msra.mxu0 0
    %2087 = vmatprep.subr.bf16.mxu0 0
    %2088 = vmatpush1.bf16.xpose.msra.mxu0 0
    %2089 = vmatprep.subr.bf16.mxu0 0
    %2090 = vmatpush1.bf16.xpose.msra.mxu0 0
    %2091 = vmatprep.subr.bf16.mxu0 0
    %2092 = vmatpush1.bf16.xpose.msra.mxu0 0
    %2093 = vmatprep.subr.bf16.mxu0 0
    %2094 = vmatpush1.bf16.xpose.msra.mxu0 0
    %2095 = vmatprep.subr.bf16.mxu0 0
    %2096 = vmatpush1.bf16.xpose.msra.mxu0 0
    %2097 = vmatprep.subr.bf16.mxu0 0
    %2098 = vmatpush1.bf16.xpose.msra.mxu0 0
    %2099 = vmatprep.subr.bf16.mxu0 0
    %2100 = vmatpush1.bf16.xpose.msra.mxu0 0
    %2101 = vmatprep.subr.bf16.mxu0 0
    %2102 = vmatpush1.bf16.xpose.msra.mxu0 0
    %2103 = vmatprep.mubr.bf16.mxu0 0
    %2104 = vmatmul.mubr.bf16.gmra.mrb[0].mxu0 %v1987
    %v2105 = vpop.f32.mrb[0].mxu0
    %v2106 = vadd.f32 0.0, %v2105
    %v2107 = vpop.f32.mrb[0].mxu0
    %v2108 = vpop.f32.mrb[0].mxu0
    %v2109 = vpop.f32.mrb[0].mxu0
    %2110 = vdwg.mxu0
    %2111 = vmatprep.subr.bf16.mxu0 0
    %2112 = vmatpush1.bf16.xpose.msra.mxu0 %v1990
    %2113 = vmatprep.subr.bf16.mxu0 0
    %2114 = vmatpush1.bf16.xpose.msra.mxu0 0
    %2115 = vmatprep.subr.bf16.mxu0 0
    %2116 = vmatpush1.bf16.xpose.msra.mxu0 0
    %2117 = vmatprep.subr.bf16.mxu0 0
    %2118 = vmatpush1.bf16.xpose.msra.mxu0 0
    %2119 = vmatprep.subr.bf16.mxu0 0
    %2120 = vmatpush1.bf16.xpose.msra.mxu0 0
    %2121 = vmatprep.subr.bf16.mxu0 0
    %2122 = vmatpush1.bf16.xpose.msra.mxu0 0
    %2123 = vmatprep.subr.bf16.mxu0 0
    %2124 = vmatpush1.bf16.xpose.msra.mxu0 0
    %2125 = vmatprep.subr.bf16.mxu0 0
    %2126 = vmatpush1.bf16.xpose.msra.mxu0 0
    %2127 = vmatprep.subr.bf16.mxu0 0
    %2128 = vmatpush1.bf16.xpose.msra.mxu0 0
    %2129 = vmatprep.subr.bf16.mxu0 0
    %2130 = vmatpush1.bf16.xpose.msra.mxu0 0
    %2131 = vmatprep.subr.bf16.mxu0 0
    %2132 = vmatpush1.bf16.xpose.msra.mxu0 0
    %2133 = vmatprep.subr.bf16.mxu0 0
    %2134 = vmatpush1.bf16.xpose.msra.mxu0 0
    %2135 = vmatprep.subr.bf16.mxu0 0
    %2136 = vmatpush1.bf16.xpose.msra.mxu0 0
    %2137 = vmatprep.subr.bf16.mxu0 0
    %2138 = vmatpush1.bf16.xpose.msra.mxu0 0
    %2139 = vmatprep.subr.bf16.mxu0 0
    %2140 = vmatpush1.bf16.xpose.msra.mxu0 0
    %2141 = vmatprep.subr.bf16.mxu0 0
    %2142 = vmatpush1.bf16.xpose.msra.mxu0 0
    %2143 = vmatprep.mubr.bf16.mxu0 0
    %2144 = vmatmul.mubr.bf16.gmra.mrb[0].mxu0 %v1988
    %v2145 = vpop.f32.mrb[0].mxu0
    %v2146 = vadd.f32 0.0, %v2145
    %v2147 = vpop.f32.mrb[0].mxu0
    %v2148 = vpop.f32.mrb[0].mxu0
    %v2149 = vpop.f32.mrb[0].mxu0
    %2150 = vdwg.mxu0
    %v2151 = vlaneseq
    %v2152 = vshrl.u32 %v2151, 7
    %v2153 = vlaneseq
    %v2154 = vand.u32 %v2153, 127
    %vm2155 = vcmp.le.s32.totalorder %v2154, %v2152
    %v2156 = vsel %vm2155, 1, 0
    %vm2157 = vcmp.eq.s32.totalorder %v2156, 1
    %v2158 = vsel %vm2157, %v2026, -1e+30
    %v2159 = vsel %vm2157, %v2066, -1e+30
    %v2160 = vsel %vm2157, %v2106, -1e+30
    %v2161 = vsel %vm2157, %v2146, -1e+30
    %vm2162 = vcmask 64512
    %v2163 = vsel %vm2162, %v2158, -inf
    %2164 = vmax.xlane.f32.xlu0 %v2163
    %v2165 = vpop.xlane.xlu0 %2164
    %v2166 = vsel %vm2162, %v2159, -inf
    %2167 = vmax.xlane.f32.xlu0 %v2166
    %v2168 = vpop.xlane.xlu0 %2167
    %v2169 = vsel %vm2162, %v2160, -inf
    %2170 = vmax.xlane.f32.xlu0 %v2169
    %v2171 = vpop.xlane.xlu0 %2170
    %v2172 = vsel %vm2162, %v2161, -inf
    %2173 = vmax.xlane.f32.xlu0 %v2172
    %v2174 = vpop.xlane.xlu0 %2173
    %v2175 = vsub.f32 %v2158, %v2165
    %v2176 = vsub.f32 %v2159, %v2168
    %v2177 = vsub.f32 %v2160, %v2171
    %v2178 = vsub.f32 %v2161, %v2174
    %v2179 = vmul.f32 %v2175, 1.442695
    %v2180 = vpow.pop %v2179
    %v2181 = vmul.f32 %v2176, 1.442695
    %v2182 = vpow.pop %v2181
    %v2183 = vmul.f32 %v2177, 1.442695
    %v2184 = vpow.pop %v2183
    %v2185 = vmul.f32 %v2178, 1.442695
    %v2186 = vpow.pop %v2185
    %v2187 = vsel %vm2162, %v2180, 0.0
    %2188 = vadd.xlane.f32.xlu0 %v2187
    %v2189 = vpop.xlane.xlu0 %2188
    %v2190 = vsel %vm2162, %v2182, 0.0
    %2191 = vadd.xlane.f32.xlu0 %v2190
    %v2192 = vpop.xlane.xlu0 %2191
    %v2193 = vsel %vm2162, %v2184, 0.0
    %2194 = vadd.xlane.f32.xlu0 %v2193
    %v2195 = vpop.xlane.xlu0 %2194
    %v2196 = vsel %vm2162, %v2186, 0.0
    %2197 = vadd.xlane.f32.xlu0 %v2196
    %v2198 = vpop.xlane.xlu0 %2197
    %v2199 = vpack.c.bf16 %v2180, %v2180
    %v2200 = vpack.c.bf16 %v2182, %v2182
    %v2201 = vpack.c.bf16 %v2184, %v2184
    %v2202 = vpack.c.bf16 %v2186, %v2186
    %v2203 = vpack.c.bf16 %v1947, %v1947
    %v2204 = vpack.c.bf16 %v1949, %v1949
    %v2206 = vsel %vm2162, %v2199, 0
    %vm2208 = vcmask 1043456
    %v2210 = vsel %vm2208, %v2203, 0
    %2212 = vmatprep.subr.bf16.mxu0 0
    %2213 = vmatpush1.bf16.msra.mxu0 %v2210
    %2214 = vmatprep.subr.bf16.mxu0 0
    %2215 = vmatpush1.bf16.msra.mxu0 0
    %2216 = vmatprep.subr.bf16.mxu0 0
    %2217 = vmatpush1.bf16.msra.mxu0 0
    %2218 = vmatprep.subr.bf16.mxu0 0
    %2219 = vmatpush1.bf16.msra.mxu0 0
    %2220 = vmatprep.subr.bf16.mxu0 0
    %2221 = vmatpush1.bf16.msra.mxu0 0
    %2222 = vmatprep.subr.bf16.mxu0 0
    %2223 = vmatpush1.bf16.msra.mxu0 0
    %2224 = vmatprep.subr.bf16.mxu0 0
    %2225 = vmatpush1.bf16.msra.mxu0 0
    %2226 = vmatprep.subr.bf16.mxu0 0
    %2227 = vmatpush1.bf16.msra.mxu0 0
    %2228 = vmatprep.subr.bf16.mxu0 0
    %2229 = vmatpush1.bf16.msra.mxu0 0
    %2230 = vmatprep.subr.bf16.mxu0 0
    %2231 = vmatpush1.bf16.msra.mxu0 0
    %2232 = vmatprep.subr.bf16.mxu0 0
    %2233 = vmatpush1.bf16.msra.mxu0 0
    %2234 = vmatprep.subr.bf16.mxu0 0
    %2235 = vmatpush1.bf16.msra.mxu0 0
    %2236 = vmatprep.subr.bf16.mxu0 0
    %2237 = vmatpush1.bf16.msra.mxu0 0
    %2238 = vmatprep.subr.bf16.mxu0 0
    %2239 = vmatpush1.bf16.msra.mxu0 0
    %2240 = vmatprep.subr.bf16.mxu0 0
    %2241 = vmatpush1.bf16.msra.mxu0 0
    %2242 = vmatprep.subr.bf16.mxu0 0
    %2243 = vmatpush1.bf16.msra.mxu0 0
    %2244 = vmatprep.mubr.bf16.mxu0 0
    %2245 = vmatmul.mubr.bf16.gmra.mrb[0].mxu0 %v2206
    %v2246 = vpop.f32.mrb[0].mxu0
    %v2247 = vadd.f32 0.0, %v2246
    %v2248 = vpop.f32.mrb[0].mxu0
    %v2249 = vpop.f32.mrb[0].mxu0
    %v2250 = vpop.f32.mrb[0].mxu0
    %2251 = vdwg.mxu0
    %v2253 = vsel %vm2162, %v2200, 0
    %2255 = vmatprep.subr.bf16.mxu0 0
    %2256 = vmatpush1.bf16.msra.mxu0 %v2210
    %2257 = vmatprep.subr.bf16.mxu0 0
    %2258 = vmatpush1.bf16.msra.mxu0 0
    %2259 = vmatprep.subr.bf16.mxu0 0
    %2260 = vmatpush1.bf16.msra.mxu0 0
    %2261 = vmatprep.subr.bf16.mxu0 0
    %2262 = vmatpush1.bf16.msra.mxu0 0
    %2263 = vmatprep.subr.bf16.mxu0 0
    %2264 = vmatpush1.bf16.msra.mxu0 0
    %2265 = vmatprep.subr.bf16.mxu0 0
    %2266 = vmatpush1.bf16.msra.mxu0 0
    %2267 = vmatprep.subr.bf16.mxu0 0
    %2268 = vmatpush1.bf16.msra.mxu0 0
    %2269 = vmatprep.subr.bf16.mxu0 0
    %2270 = vmatpush1.bf16.msra.mxu0 0
    %2271 = vmatprep.subr.bf16.mxu0 0
    %2272 = vmatpush1.bf16.msra.mxu0 0
    %2273 = vmatprep.subr.bf16.mxu0 0
    %2274 = vmatpush1.bf16.msra.mxu0 0
    %2275 = vmatprep.subr.bf16.mxu0 0
    %2276 = vmatpush1.bf16.msra.mxu0 0
    %2277 = vmatprep.subr.bf16.mxu0 0
    %2278 = vmatpush1.bf16.msra.mxu0 0
    %2279 = vmatprep.subr.bf16.mxu0 0
    %2280 = vmatpush1.bf16.msra.mxu0 0
    %2281 = vmatprep.subr.bf16.mxu0 0
    %2282 = vmatpush1.bf16.msra.mxu0 0
    %2283 = vmatprep.subr.bf16.mxu0 0
    %2284 = vmatpush1.bf16.msra.mxu0 0
    %2285 = vmatprep.subr.bf16.mxu0 0
    %2286 = vmatpush1.bf16.msra.mxu0 0
    %2287 = vmatprep.mubr.bf16.mxu0 0
    %2288 = vmatmul.mubr.bf16.gmra.mrb[0].mxu0 %v2253
    %v2289 = vpop.f32.mrb[0].mxu0
    %v2290 = vadd.f32 0.0, %v2289
    %v2291 = vpop.f32.mrb[0].mxu0
    %v2292 = vpop.f32.mrb[0].mxu0
    %v2293 = vpop.f32.mrb[0].mxu0
    %2294 = vdwg.mxu0
    %v2296 = vsel %vm2162, %v2201, 0
    %v2299 = vsel %vm2208, %v2204, 0
    %2301 = vmatprep.subr.bf16.mxu0 0
    %2302 = vmatpush1.bf16.msra.mxu0 %v2299
    %2303 = vmatprep.subr.bf16.mxu0 0
    %2304 = vmatpush1.bf16.msra.mxu0 0
    %2305 = vmatprep.subr.bf16.mxu0 0
    %2306 = vmatpush1.bf16.msra.mxu0 0
    %2307 = vmatprep.subr.bf16.mxu0 0
    %2308 = vmatpush1.bf16.msra.mxu0 0
    %2309 = vmatprep.subr.bf16.mxu0 0
    %2310 = vmatpush1.bf16.msra.mxu0 0
    %2311 = vmatprep.subr.bf16.mxu0 0
    %2312 = vmatpush1.bf16.msra.mxu0 0
    %2313 = vmatprep.subr.bf16.mxu0 0
    %2314 = vmatpush1.bf16.msra.mxu0 0
    %2315 = vmatprep.subr.bf16.mxu0 0
    %2316 = vmatpush1.bf16.msra.mxu0 0
    %2317 = vmatprep.subr.bf16.mxu0 0
    %2318 = vmatpush1.bf16.msra.mxu0 0
    %2319 = vmatprep.subr.bf16.mxu0 0
    %2320 = vmatpush1.bf16.msra.mxu0 0
    %2321 = vmatprep.subr.bf16.mxu0 0
    %2322 = vmatpush1.bf16.msra.mxu0 0
    %2323 = vmatprep.subr.bf16.mxu0 0
    %2324 = vmatpush1.bf16.msra.mxu0 0
    %2325 = vmatprep.subr.bf16.mxu0 0
    %2326 = vmatpush1.bf16.msra.mxu0 0
    %2327 = vmatprep.subr.bf16.mxu0 0
    %2328 = vmatpush1.bf16.msra.mxu0 0
    %2329 = vmatprep.subr.bf16.mxu0 0
    %2330 = vmatpush1.bf16.msra.mxu0 0
    %2331 = vmatprep.subr.bf16.mxu0 0
    %2332 = vmatpush1.bf16.msra.mxu0 0
    %2333 = vmatprep.mubr.bf16.mxu0 0
    %2334 = vmatmul.mubr.bf16.gmra.mrb[0].mxu0 %v2296
    %v2335 = vpop.f32.mrb[0].mxu0
    %v2336 = vadd.f32 0.0, %v2335
    %v2337 = vpop.f32.mrb[0].mxu0
    %v2338 = vpop.f32.mrb[0].mxu0
    %v2339 = vpop.f32.mrb[0].mxu0
    %2340 = vdwg.mxu0
    %v2342 = vsel %vm2162, %v2202, 0
    %2344 = vmatprep.subr.bf16.mxu0 0
    %2345 = vmatpush1.bf16.msra.mxu0 %v2299
    %2346 = vmatprep.subr.bf16.mxu0 0
    %2347 = vmatpush1.bf16.msra.mxu0 0
    %2348 = vmatprep.subr.bf16.mxu0 0
    %2349 = vmatpush1.bf16.msra.mxu0 0
    %2350 = vmatprep.subr.bf16.mxu0 0
    %2351 = vmatpush1.bf16.msra.mxu0 0
    %2352 = vmatprep.subr.bf16.mxu0 0
    %2353 = vmatpush1.bf16.msra.mxu0 0
    %2354 = vmatprep.subr.bf16.mxu0 0
    %2355 = vmatpush1.bf16.msra.mxu0 0
    %2356 = vmatprep.subr.bf16.mxu0 0
    %2357 = vmatpush1.bf16.msra.mxu0 0
    %2358 = vmatprep.subr.bf16.mxu0 0
    %2359 = vmatpush1.bf16.msra.mxu0 0
    %2360 = vmatprep.subr.bf16.mxu0 0
    %2361 = vmatpush1.bf16.msra.mxu0 0
    %2362 = vmatprep.subr.bf16.mxu0 0
    %2363 = vmatpush1.bf16.msra.mxu0 0
    %2364 = vmatprep.subr.bf16.mxu0 0
    %2365 = vmatpush1.bf16.msra.mxu0 0
    %2366 = vmatprep.subr.bf16.mxu0 0
    %2367 = vmatpush1.bf16.msra.mxu0 0
    %2368 = vmatprep.subr.bf16.mxu0 0
    %2369 = vmatpush1.bf16.msra.mxu0 0
    %2370 = vmatprep.subr.bf16.mxu0 0
    %2371 = vmatpush1.bf16.msra.mxu0 0
    %2372 = vmatprep.subr.bf16.mxu0 0
    %2373 = vmatpush1.bf16.msra.mxu0 0
    %2374 = vmatprep.subr.bf16.mxu0 0
    %2375 = vmatpush1.bf16.msra.mxu0 0
    %2376 = vmatprep.mubr.bf16.mxu0 0
    %2377 = vmatmul.mubr.bf16.gmra.mrb[0].mxu0 %v2342
    %v2378 = vpop.f32.mrb[0].mxu0
    %v2379 = vadd.f32 0.0, %v2378
    %v2380 = vpop.f32.mrb[0].mxu0
    %v2381 = vpop.f32.mrb[0].mxu0
    %v2382 = vpop.f32.mrb[0].mxu0
    %2383 = vdwg.mxu0
    %v2384 = vrcp.pop %v2189
    %v2385 = vrcp.pop %v2192
    %v2386 = vrcp.pop %v2195
    %v2387 = vrcp.pop %v2198
    %v2388 = vmul.f32 %v2247, %v2384
    %v2389 = vmul.f32 %v2290, %v2385
    %v2390 = vmul.f32 %v2336, %v2386
    %v2391 = vmul.f32 %v2379, %v2387
    %v2392 = vpack.c.bf16 %v2388, %v2388
    %v2393 = vpack.c.bf16 %v2389, %v2389
    %v2394 = vpack.c.bf16 %v2390, %v2390
    %v2395 = vpack.c.bf16 %v2391, %v2391
    %v2396 = vld [vmem:[#allocation7] sm:$0xff]
    %v2397 = vld [vmem:[#allocation7 + $0x8] sm:$0xff]
    %v2398 = vld [vmem:[#allocation7 + $0x10] sm:$0xff]
    %v2399 = vld [vmem:[#allocation7 + $0x18] sm:$0xff]
    %v2400 = vld [vmem:[#allocation7 + $0x20] sm:$0xff]
    %v2401 = vld [vmem:[#allocation7 + $0x28] sm:$0xff]
    %v2402 = vld [vmem:[#allocation7 + $0x30] sm:$0xff]
    %v2403 = vld [vmem:[#allocation7 + $0x38] sm:$0xff]
    %v2404 = vld [vmem:[#allocation7 + $0x40] sm:$0xff]
    %v2405 = vld [vmem:[#allocation7 + $0x48] sm:$0xff]
    %v2406 = vld [vmem:[#allocation7 + $0x50] sm:$0xff]
    %v2407 = vld [vmem:[#allocation7 + $0x58] sm:$0xff]
    %v2408 = vld [vmem:[#allocation7 + $0x60] sm:$0xff]
    %v2409 = vld [vmem:[#allocation7 + $0x68] sm:$0xff]
    %v2410 = vld [vmem:[#allocation7 + $0x70] sm:$0xff]
    %v2411 = vld [vmem:[#allocation7 + $0x78] sm:$0xff]
    %v2412 = vld [vmem:[#allocation7 + $0x80] sm:$0xff]
    %v2413 = vld [vmem:[#allocation7 + $0x88] sm:$0xff]
    %v2414 = vld [vmem:[#allocation7 + $0x90] sm:$0xff]
    %v2415 = vld [vmem:[#allocation7 + $0x98] sm:$0xff]
    %v2416 = vld [vmem:[#allocation7 + $0xa0] sm:$0xff]
    %v2417 = vld [vmem:[#allocation7 + $0xa8] sm:$0xff]
    %v2418 = vld [vmem:[#allocation7 + $0xb0] sm:$0xff]
    %v2419 = vld [vmem:[#allocation7 + $0xb8] sm:$0xff]
    %v2420 = vld [vmem:[#allocation7 + $0xc0] sm:$0xff]
    %v2421 = vld [vmem:[#allocation7 + $0xc8] sm:$0xff]
    %v2422 = vld [vmem:[#allocation7 + $0xd0] sm:$0xff]
    %v2423 = vld [vmem:[#allocation7 + $0xd8] sm:$0xff]
    %v2424 = vld [vmem:[#allocation7 + $0xe0] sm:$0xff]
    %v2425 = vld [vmem:[#allocation7 + $0xe8] sm:$0xff]
    %v2426 = vld [vmem:[#allocation7 + $0xf0] sm:$0xff]
    %v2427 = vld [vmem:[#allocation7 + $0xf8] sm:$0xff]
    %v2428 = vld [vmem:[#allocation7 + $0x100] sm:$0xff]
    %v2429 = vld [vmem:[#allocation7 + $0x108] sm:$0xff]
    %v2430 = vld [vmem:[#allocation7 + $0x110] sm:$0xff]
    %v2431 = vld [vmem:[#allocation7 + $0x118] sm:$0xff]
    %v2432 = vld [vmem:[#allocation7 + $0x120] sm:$0xff]
    %v2433 = vld [vmem:[#allocation7 + $0x128] sm:$0xff]
    %v2434 = vld [vmem:[#allocation7 + $0x130] sm:$0xff]
    %v2435 = vld [vmem:[#allocation7 + $0x138] sm:$0xff]
    %v2436 = vld [vmem:[#allocation7 + $0x140] sm:$0xff]
    %v2437 = vld [vmem:[#allocation7 + $0x148] sm:$0xff]
    %v2438 = vld [vmem:[#allocation7 + $0x150] sm:$0xff]
    %v2439 = vld [vmem:[#allocation7 + $0x158] sm:$0xff]
    %v2440 = vld [vmem:[#allocation7 + $0x160] sm:$0xff]
    %v2441 = vld [vmem:[#allocation7 + $0x168] sm:$0xff]
    %v2442 = vld [vmem:[#allocation7 + $0x170] sm:$0xff]
    %v2443 = vld [vmem:[#allocation7 + $0x178] sm:$0xff]
    %v2444 = vld [vmem:[#allocation7 + $0x180] sm:$0xff]
    %v2445 = vld [vmem:[#allocation7 + $0x188] sm:$0xff]
    %v2446 = vld [vmem:[#allocation7 + $0x190] sm:$0xff]
    %v2447 = vld [vmem:[#allocation7 + $0x198] sm:$0xff]
    %v2448 = vld [vmem:[#allocation7 + $0x1a0] sm:$0xff]
    %v2449 = vld [vmem:[#allocation7 + $0x1a8] sm:$0xff]
    %v2450 = vld [vmem:[#allocation7 + $0x1b0] sm:$0xff]
    %v2451 = vld [vmem:[#allocation7 + $0x1b8] sm:$0xff]
    %v2452 = vld [vmem:[#allocation7 + $0x1c0] sm:$0xff]
    %v2453 = vld [vmem:[#allocation7 + $0x1c8] sm:$0xff]
    %v2454 = vld [vmem:[#allocation7 + $0x1d0] sm:$0xff]
    %v2455 = vld [vmem:[#allocation7 + $0x1d8] sm:$0xff]
    %v2456 = vld [vmem:[#allocation7 + $0x1e0] sm:$0xff]
    %v2457 = vld [vmem:[#allocation7 + $0x1e8] sm:$0xff]
    %v2458 = vld [vmem:[#allocation7 + $0x1f0] sm:$0xff]
    %v2459 = vld [vmem:[#allocation7 + $0x1f8] sm:$0xff]
    %v2460 = vld [vmem:[#allocation7 + $0x200] sm:$0xff]
    %v2461 = vld [vmem:[#allocation7 + $0x208] sm:$0xff]
    %v2462 = vld [vmem:[#allocation7 + $0x210] sm:$0xff]
    %v2463 = vld [vmem:[#allocation7 + $0x218] sm:$0xff]
    %v2464 = vld [vmem:[#allocation7 + $0x220] sm:$0xff]
    %v2465 = vld [vmem:[#allocation7 + $0x228] sm:$0xff]
    %v2466 = vld [vmem:[#allocation7 + $0x230] sm:$0xff]
    %v2467 = vld [vmem:[#allocation7 + $0x238] sm:$0xff]
    %v2468 = vld [vmem:[#allocation7 + $0x240] sm:$0xff]
    %v2469 = vld [vmem:[#allocation7 + $0x248] sm:$0xff]
    %v2470 = vld [vmem:[#allocation7 + $0x250] sm:$0xff]
    %v2471 = vld [vmem:[#allocation7 + $0x258] sm:$0xff]
    %v2472 = vld [vmem:[#allocation7 + $0x260] sm:$0xff]
    %v2473 = vld [vmem:[#allocation7 + $0x268] sm:$0xff]
    %v2474 = vld [vmem:[#allocation7 + $0x270] sm:$0xff]
    %v2475 = vld [vmem:[#allocation7 + $0x278] sm:$0xff]
    %v2476 = vld [vmem:[#allocation7 + $0x280] sm:$0xff]
    %v2477 = vld [vmem:[#allocation7 + $0x288] sm:$0xff]
    %v2478 = vld [vmem:[#allocation7 + $0x290] sm:$0xff]
    %v2479 = vld [vmem:[#allocation7 + $0x298] sm:$0xff]
    %v2480 = vld [vmem:[#allocation7 + $0x2a0] sm:$0xff]
    %v2481 = vld [vmem:[#allocation7 + $0x2a8] sm:$0xff]
    %v2482 = vld [vmem:[#allocation7 + $0x2b0] sm:$0xff]
    %v2483 = vld [vmem:[#allocation7 + $0x2b8] sm:$0xff]
    %v2484 = vld [vmem:[#allocation7 + $0x2c0] sm:$0xff]
    %v2485 = vld [vmem:[#allocation7 + $0x2c8] sm:$0xff]
    %v2486 = vld [vmem:[#allocation7 + $0x2d0] sm:$0xff]
    %v2487 = vld [vmem:[#allocation7 + $0x2d8] sm:$0xff]
    %v2488 = vld [vmem:[#allocation7 + $0x2e0] sm:$0xff]
    %v2489 = vld [vmem:[#allocation7 + $0x2e8] sm:$0xff]
    %v2490 = vld [vmem:[#allocation7 + $0x2f0] sm:$0xff]
    %v2491 = vld [vmem:[#allocation7 + $0x2f8] sm:$0xff]
    %v2492 = vld [vmem:[#allocation7 + $0x300] sm:$0xff]
    %v2493 = vld [vmem:[#allocation7 + $0x308] sm:$0xff]
    %v2494 = vld [vmem:[#allocation7 + $0x310] sm:$0xff]
    %v2495 = vld [vmem:[#allocation7 + $0x318] sm:$0xff]
    %v2496 = vld [vmem:[#allocation7 + $0x320] sm:$0xff]
    %v2497 = vld [vmem:[#allocation7 + $0x328] sm:$0xff]
    %v2498 = vld [vmem:[#allocation7 + $0x330] sm:$0xff]
    %v2499 = vld [vmem:[#allocation7 + $0x338] sm:$0xff]
    %v2500 = vld [vmem:[#allocation7 + $0x340] sm:$0xff]
    %v2501 = vld [vmem:[#allocation7 + $0x348] sm:$0xff]
    %v2502 = vld [vmem:[#allocation7 + $0x350] sm:$0xff]
    %v2503 = vld [vmem:[#allocation7 + $0x358] sm:$0xff]
    %v2504 = vld [vmem:[#allocation7 + $0x360] sm:$0xff]
    %v2505 = vld [vmem:[#allocation7 + $0x368] sm:$0xff]
    %v2506 = vld [vmem:[#allocation7 + $0x370] sm:$0xff]
    %v2507 = vld [vmem:[#allocation7 + $0x378] sm:$0xff]
    %v2508 = vld [vmem:[#allocation7 + $0x380] sm:$0xff]
    %v2509 = vld [vmem:[#allocation7 + $0x388] sm:$0xff]
    %v2510 = vld [vmem:[#allocation7 + $0x390] sm:$0xff]
    %v2511 = vld [vmem:[#allocation7 + $0x398] sm:$0xff]
    %v2512 = vld [vmem:[#allocation7 + $0x3a0] sm:$0xff]
    %v2513 = vld [vmem:[#allocation7 + $0x3a8] sm:$0xff]
    %v2514 = vld [vmem:[#allocation7 + $0x3b0] sm:$0xff]
    %v2515 = vld [vmem:[#allocation7 + $0x3b8] sm:$0xff]
    %v2516 = vld [vmem:[#allocation7 + $0x3c0] sm:$0xff]
    %v2517 = vld [vmem:[#allocation7 + $0x3c8] sm:$0xff]
    %v2518 = vld [vmem:[#allocation7 + $0x3d0] sm:$0xff]
    %v2519 = vld [vmem:[#allocation7 + $0x3d8] sm:$0xff]
    %v2520 = vld [vmem:[#allocation7 + $0x3e0] sm:$0xff]
    %v2521 = vld [vmem:[#allocation7 + $0x3e8] sm:$0xff]
    %v2522 = vld [vmem:[#allocation7 + $0x3f0] sm:$0xff]
    %v2523 = vld [vmem:[#allocation7 + $0x3f8] sm:$0xff]
    %v2652 = vunpack.c.l.b16 %v2396
    %v2653 = vunpack.c.h.b16 %v2396
    %v2654 = vunpack.c.l.b16 %v2397
    %v2655 = vunpack.c.h.b16 %v2397
    %v2656 = vunpack.c.l.b16 %v2398
    %v2657 = vunpack.c.h.b16 %v2398
    %v2658 = vunpack.c.l.b16 %v2399
    %v2659 = vunpack.c.h.b16 %v2399
    %v2660 = vunpack.c.l.b16 %v2400
    %v2661 = vunpack.c.h.b16 %v2400
    %v2662 = vunpack.c.l.b16 %v2401
    %v2663 = vunpack.c.h.b16 %v2401
    %v2664 = vunpack.c.l.b16 %v2402
    %v2665 = vunpack.c.h.b16 %v2402
    %v2666 = vunpack.c.l.b16 %v2403
    %v2667 = vunpack.c.h.b16 %v2403
    %v2668 = vunpack.c.l.b16 %v2404
    %v2669 = vunpack.c.h.b16 %v2404
    %v2670 = vunpack.c.l.b16 %v2405
    %v2671 = vunpack.c.h.b16 %v2405
    %v2672 = vunpack.c.l.b16 %v2406
    %v2673 = vunpack.c.h.b16 %v2406
    %v2674 = vunpack.c.l.b16 %v2407
    %v2675 = vunpack.c.h.b16 %v2407
    %v2676 = vunpack.c.l.b16 %v2408
    %v2677 = vunpack.c.h.b16 %v2408
    %v2678 = vunpack.c.l.b16 %v2409
    %v2679 = vunpack.c.h.b16 %v2409
    %v2680 = vunpack.c.l.b16 %v2410
    %v2681 = vunpack.c.h.b16 %v2410
    %v2682 = vunpack.c.l.b16 %v2411
    %v2683 = vunpack.c.h.b16 %v2411
    %v2684 = vunpack.c.l.b16 %v2412
    %v2685 = vunpack.c.h.b16 %v2412
    %v2686 = vunpack.c.l.b16 %v2413
    %v2687 = vunpack.c.h.b16 %v2413
    %v2688 = vunpack.c.l.b16 %v2414
    %v2689 = vunpack.c.h.b16 %v2414
    %v2690 = vunpack.c.l.b16 %v2415
    %v2691 = vunpack.c.h.b16 %v2415
    %v2692 = vunpack.c.l.b16 %v2416
    %v2693 = vunpack.c.h.b16 %v2416
    %v2694 = vunpack.c.l.b16 %v2417
    %v2695 = vunpack.c.h.b16 %v2417
    %v2696 = vunpack.c.l.b16 %v2418
    %v2697 = vunpack.c.h.b16 %v2418
    %v2698 = vunpack.c.l.b16 %v2419
    %v2699 = vunpack.c.h.b16 %v2419
    %v2700 = vunpack.c.l.b16 %v2420
    %v2701 = vunpack.c.h.b16 %v2420
    %v2702 = vunpack.c.l.b16 %v2421
    %v2703 = vunpack.c.h.b16 %v2421
    %v2704 = vunpack.c.l.b16 %v2422
    %v2705 = vunpack.c.h.b16 %v2422
    %v2706 = vunpack.c.l.b16 %v2423
    %v2707 = vunpack.c.h.b16 %v2423
    %v2708 = vunpack.c.l.b16 %v2424
    %v2709 = vunpack.c.h.b16 %v2424
    %v2710 = vunpack.c.l.b16 %v2425
    %v2711 = vunpack.c.h.b16 %v2425
    %v2712 = vunpack.c.l.b16 %v2426
    %v2713 = vunpack.c.h.b16 %v2426
    %v2714 = vunpack.c.l.b16 %v2427
    %v2715 = vunpack.c.h.b16 %v2427
    %v2716 = vunpack.c.l.b16 %v2428
    %v2717 = vunpack.c.h.b16 %v2428
    %v2718 = vunpack.c.l.b16 %v2429
    %v2719 = vunpack.c.h.b16 %v2429
    %v2720 = vunpack.c.l.b16 %v2430
    %v2721 = vunpack.c.h.b16 %v2430
    %v2722 = vunpack.c.l.b16 %v2431
    %v2723 = vunpack.c.h.b16 %v2431
    %v2724 = vunpack.c.l.b16 %v2432
    %v2725 = vunpack.c.h.b16 %v2432
    %v2726 = vunpack.c.l.b16 %v2433
    %v2727 = vunpack.c.h.b16 %v2433
    %v2728 = vunpack.c.l.b16 %v2434
    %v2729 = vunpack.c.h.b16 %v2434
    %v2730 = vunpack.c.l.b16 %v2435
    %v2731 = vunpack.c.h.b16 %v2435
    %v2732 = vunpack.c.l.b16 %v2436
    %v2733 = vunpack.c.h.b16 %v2436
    %v2734 = vunpack.c.l.b16 %v2437
    %v2735 = vunpack.c.h.b16 %v2437
    %v2736 = vunpack.c.l.b16 %v2438
    %v2737 = vunpack.c.h.b16 %v2438
    %v2738 = vunpack.c.l.b16 %v2439
    %v2739 = vunpack.c.h.b16 %v2439
    %v2740 = vunpack.c.l.b16 %v2440
    %v2741 = vunpack.c.h.b16 %v2440
    %v2742 = vunpack.c.l.b16 %v2441
    %v2743 = vunpack.c.h.b16 %v2441
    %v2744 = vunpack.c.l.b16 %v2442
    %v2745 = vunpack.c.h.b16 %v2442
    %v2746 = vunpack.c.l.b16 %v2443
    %v2747 = vunpack.c.h.b16 %v2443
    %v2748 = vunpack.c.l.b16 %v2444
    %v2749 = vunpack.c.h.b16 %v2444
    %v2750 = vunpack.c.l.b16 %v2445
    %v2751 = vunpack.c.h.b16 %v2445
    %v2752 = vunpack.c.l.b16 %v2446
    %v2753 = vunpack.c.h.b16 %v2446
    %v2754 = vunpack.c.l.b16 %v2447
    %v2755 = vunpack.c.h.b16 %v2447
    %v2756 = vunpack.c.l.b16 %v2448
    %v2757 = vunpack.c.h.b16 %v2448
    %v2758 = vunpack.c.l.b16 %v2449
    %v2759 = vunpack.c.h.b16 %v2449
    %v2760 = vunpack.c.l.b16 %v2450
    %v2761 = vunpack.c.h.b16 %v2450
    %v2762 = vunpack.c.l.b16 %v2451
    %v2763 = vunpack.c.h.b16 %v2451
    %v2764 = vunpack.c.l.b16 %v2452
    %v2765 = vunpack.c.h.b16 %v2452
    %v2766 = vunpack.c.l.b16 %v2453
    %v2767 = vunpack.c.h.b16 %v2453
    %v2768 = vunpack.c.l.b16 %v2454
    %v2769 = vunpack.c.h.b16 %v2454
    %v2770 = vunpack.c.l.b16 %v2455
    %v2771 = vunpack.c.h.b16 %v2455
    %v2772 = vunpack.c.l.b16 %v2456
    %v2773 = vunpack.c.h.b16 %v2456
    %v2774 = vunpack.c.l.b16 %v2457
    %v2775 = vunpack.c.h.b16 %v2457
    %v2776 = vunpack.c.l.b16 %v2458
    %v2777 = vunpack.c.h.b16 %v2458
    %v2778 = vunpack.c.l.b16 %v2459
    %v2779 = vunpack.c.h.b16 %v2459
    %v2780 = vunpack.c.l.b16 %v2460
    %v2781 = vunpack.c.h.b16 %v2460
    %v2782 = vunpack.c.l.b16 %v2461
    %v2783 = vunpack.c.h.b16 %v2461
    %v2784 = vunpack.c.l.b16 %v2462
    %v2785 = vunpack.c.h.b16 %v2462
    %v2786 = vunpack.c.l.b16 %v2463
    %v2787 = vunpack.c.h.b16 %v2463
    %v2788 = vunpack.c.l.b16 %v2464
    %v2789 = vunpack.c.h.b16 %v2464
    %v2790 = vunpack.c.l.b16 %v2465
    %v2791 = vunpack.c.h.b16 %v2465
    %v2792 = vunpack.c.l.b16 %v2466
    %v2793 = vunpack.c.h.b16 %v2466
    %v2794 = vunpack.c.l.b16 %v2467
    %v2795 = vunpack.c.h.b16 %v2467
    %v2796 = vunpack.c.l.b16 %v2468
    %v2797 = vunpack.c.h.b16 %v2468
    %v2798 = vunpack.c.l.b16 %v2469
    %v2799 = vunpack.c.h.b16 %v2469
    %v2800 = vunpack.c.l.b16 %v2470
    %v2801 = vunpack.c.h.b16 %v2470
    %v2802 = vunpack.c.l.b16 %v2471
    %v2803 = vunpack.c.h.b16 %v2471
    %v2804 = vunpack.c.l.b16 %v2472
    %v2805 = vunpack.c.h.b16 %v2472
    %v2806 = vunpack.c.l.b16 %v2473
    %v2807 = vunpack.c.h.b16 %v2473
    %v2808 = vunpack.c.l.b16 %v2474
    %v2809 = vunpack.c.h.b16 %v2474
    %v2810 = vunpack.c.l.b16 %v2475
    %v2811 = vunpack.c.h.b16 %v2475
    %v2812 = vunpack.c.l.b16 %v2476
    %v2813 = vunpack.c.h.b16 %v2476
    %v2814 = vunpack.c.l.b16 %v2477
    %v2815 = vunpack.c.h.b16 %v2477
    %v2816 = vunpack.c.l.b16 %v2478
    %v2817 = vunpack.c.h.b16 %v2478
    %v2818 = vunpack.c.l.b16 %v2479
    %v2819 = vunpack.c.h.b16 %v2479
    %v2820 = vunpack.c.l.b16 %v2480
    %v2821 = vunpack.c.h.b16 %v2480
    %v2822 = vunpack.c.l.b16 %v2481
    %v2823 = vunpack.c.h.b16 %v2481
    %v2824 = vunpack.c.l.b16 %v2482
    %v2825 = vunpack.c.h.b16 %v2482
    %v2826 = vunpack.c.l.b16 %v2483
    %v2827 = vunpack.c.h.b16 %v2483
    %v2828 = vunpack.c.l.b16 %v2484
    %v2829 = vunpack.c.h.b16 %v2484
    %v2830 = vunpack.c.l.b16 %v2485
    %v2831 = vunpack.c.h.b16 %v2485
    %v2832 = vunpack.c.l.b16 %v2486
    %v2833 = vunpack.c.h.b16 %v2486
    %v2834 = vunpack.c.l.b16 %v2487
    %v2835 = vunpack.c.h.b16 %v2487
    %v2836 = vunpack.c.l.b16 %v2488
    %v2837 = vunpack.c.h.b16 %v2488
    %v2838 = vunpack.c.l.b16 %v2489
    %v2839 = vunpack.c.h.b16 %v2489
    %v2840 = vunpack.c.l.b16 %v2490
    %v2841 = vunpack.c.h.b16 %v2490
    %v2842 = vunpack.c.l.b16 %v2491
    %v2843 = vunpack.c.h.b16 %v2491
    %v2844 = vunpack.c.l.b16 %v2492
    %v2845 = vunpack.c.h.b16 %v2492
    %v2846 = vunpack.c.l.b16 %v2493
    %v2847 = vunpack.c.h.b16 %v2493
    %v2848 = vunpack.c.l.b16 %v2494
    %v2849 = vunpack.c.h.b16 %v2494
    %v2850 = vunpack.c.l.b16 %v2495
    %v2851 = vunpack.c.h.b16 %v2495
    %v2852 = vunpack.c.l.b16 %v2496
    %v2853 = vunpack.c.h.b16 %v2496
    %v2854 = vunpack.c.l.b16 %v2497
    %v2855 = vunpack.c.h.b16 %v2497
    %v2856 = vunpack.c.l.b16 %v2498
    %v2857 = vunpack.c.h.b16 %v2498
    %v2858 = vunpack.c.l.b16 %v2499
    %v2859 = vunpack.c.h.b16 %v2499
    %v2860 = vunpack.c.l.b16 %v2500
    %v2861 = vunpack.c.h.b16 %v2500
    %v2862 = vunpack.c.l.b16 %v2501
    %v2863 = vunpack.c.h.b16 %v2501
    %v2864 = vunpack.c.l.b16 %v2502
    %v2865 = vunpack.c.h.b16 %v2502
    %v2866 = vunpack.c.l.b16 %v2503
    %v2867 = vunpack.c.h.b16 %v2503
    %v2868 = vunpack.c.l.b16 %v2504
    %v2869 = vunpack.c.h.b16 %v2504
    %v2870 = vunpack.c.l.b16 %v2505
    %v2871 = vunpack.c.h.b16 %v2505
    %v2872 = vunpack.c.l.b16 %v2506
    %v2873 = vunpack.c.h.b16 %v2506
    %v2874 = vunpack.c.l.b16 %v2507
    %v2875 = vunpack.c.h.b16 %v2507
    %v2876 = vunpack.c.l.b16 %v2508
    %v2877 = vunpack.c.h.b16 %v2508
    %v2878 = vunpack.c.l.b16 %v2509
    %v2879 = vunpack.c.h.b16 %v2509
    %v2880 = vunpack.c.l.b16 %v2510
    %v2881 = vunpack.c.h.b16 %v2510
    %v2882 = vunpack.c.l.b16 %v2511
    %v2883 = vunpack.c.h.b16 %v2511
    %v2884 = vunpack.c.l.b16 %v2512
    %v2885 = vunpack.c.h.b16 %v2512
    %v2886 = vunpack.c.l.b16 %v2513
    %v2887 = vunpack.c.h.b16 %v2513
    %v2888 = vunpack.c.l.b16 %v2514
    %v2889 = vunpack.c.h.b16 %v2514
    %v2890 = vunpack.c.l.b16 %v2515
    %v2891 = vunpack.c.h.b16 %v2515
    %v2892 = vunpack.c.l.b16 %v2516
    %v2893 = vunpack.c.h.b16 %v2516
    %v2894 = vunpack.c.l.b16 %v2517
    %v2895 = vunpack.c.h.b16 %v2517
    %v2896 = vunpack.c.l.b16 %v2518
    %v2897 = vunpack.c.h.b16 %v2518
    %v2898 = vunpack.c.l.b16 %v2519
    %v2899 = vunpack.c.h.b16 %v2519
    %v2900 = vunpack.c.l.b16 %v2520
    %v2901 = vunpack.c.h.b16 %v2520
    %v2902 = vunpack.c.l.b16 %v2521
    %v2903 = vunpack.c.h.b16 %v2521
    %v2904 = vunpack.c.l.b16 %v2522
    %v2905 = vunpack.c.h.b16 %v2522
    %v2906 = vunpack.c.l.b16 %v2523
    %v2907 = vunpack.c.h.b16 %v2523
    %v2908 = vpack.c.b16 %v2656, %v2652
    %v2909 = vpack.c.b16 %v2657, %v2653
    %v2910 = vpack.c.b16 %v2658, %v2654
    %v2911 = vpack.c.b16 %v2659, %v2655
    %v2912 = vpack.c.b16 %v2664, %v2660
    %v2913 = vpack.c.b16 %v2665, %v2661
    %v2914 = vpack.c.b16 %v2666, %v2662
    %v2915 = vpack.c.b16 %v2667, %v2663
    %v2916 = vpack.c.b16 %v2672, %v2668
    %v2917 = vpack.c.b16 %v2673, %v2669
    %v2918 = vpack.c.b16 %v2674, %v2670
    %v2919 = vpack.c.b16 %v2675, %v2671
    %v2920 = vpack.c.b16 %v2680, %v2676
    %v2921 = vpack.c.b16 %v2681, %v2677
    %v2922 = vpack.c.b16 %v2682, %v2678
    %v2923 = vpack.c.b16 %v2683, %v2679
    %v2924 = vpack.c.b16 %v2688, %v2684
    %v2925 = vpack.c.b16 %v2689, %v2685
    %v2926 = vpack.c.b16 %v2690, %v2686
    %v2927 = vpack.c.b16 %v2691, %v2687
    %v2928 = vpack.c.b16 %v2696, %v2692
    %v2929 = vpack.c.b16 %v2697, %v2693
    %v2930 = vpack.c.b16 %v2698, %v2694
    %v2931 = vpack.c.b16 %v2699, %v2695
    %v2932 = vpack.c.b16 %v2704, %v2700
    %v2933 = vpack.c.b16 %v2705, %v2701
    %v2934 = vpack.c.b16 %v2706, %v2702
    %v2935 = vpack.c.b16 %v2707, %v2703
    %v2936 = vpack.c.b16 %v2712, %v2708
    %v2937 = vpack.c.b16 %v2713, %v2709
    %v2938 = vpack.c.b16 %v2714, %v2710
    %v2939 = vpack.c.b16 %v2715, %v2711
    %v2940 = vpack.c.b16 %v2720, %v2716
    %v2941 = vpack.c.b16 %v2721, %v2717
    %v2942 = vpack.c.b16 %v2722, %v2718
    %v2943 = vpack.c.b16 %v2723, %v2719
    %v2944 = vpack.c.b16 %v2728, %v2724
    %v2945 = vpack.c.b16 %v2729, %v2725
    %v2946 = vpack.c.b16 %v2730, %v2726
    %v2947 = vpack.c.b16 %v2731, %v2727
    %v2948 = vpack.c.b16 %v2736, %v2732
    %v2949 = vpack.c.b16 %v2737, %v2733
    %v2950 = vpack.c.b16 %v2738, %v2734
    %v2951 = vpack.c.b16 %v2739, %v2735
    %v2952 = vpack.c.b16 %v2744, %v2740
    %v2953 = vpack.c.b16 %v2745, %v2741
    %v2954 = vpack.c.b16 %v2746, %v2742
    %v2955 = vpack.c.b16 %v2747, %v2743
    %v2956 = vpack.c.b16 %v2752, %v2748
    %v2957 = vpack.c.b16 %v2753, %v2749
    %v2958 = vpack.c.b16 %v2754, %v2750
    %v2959 = vpack.c.b16 %v2755, %v2751
    %v2960 = vpack.c.b16 %v2760, %v2756
    %v2961 = vpack.c.b16 %v2761, %v2757
    %v2962 = vpack.c.b16 %v2762, %v2758
    %v2963 = vpack.c.b16 %v2763, %v2759
    %v2964 = vpack.c.b16 %v2768, %v2764
    %v2965 = vpack.c.b16 %v2769, %v2765
    %v2966 = vpack.c.b16 %v2770, %v2766
    %v2967 = vpack.c.b16 %v2771, %v2767
    %v2968 = vpack.c.b16 %v2776, %v2772
    %v2969 = vpack.c.b16 %v2777, %v2773
    %v2970 = vpack.c.b16 %v2778, %v2774
    %v2971 = vpack.c.b16 %v2779, %v2775
    %v2972 = vpack.c.b16 %v2784, %v2780
    %v2973 = vpack.c.b16 %v2785, %v2781
    %v2974 = vpack.c.b16 %v2786, %v2782
    %v2975 = vpack.c.b16 %v2787, %v2783
    %v2976 = vpack.c.b16 %v2792, %v2788
    %v2977 = vpack.c.b16 %v2793, %v2789
    %v2978 = vpack.c.b16 %v2794, %v2790
    %v2979 = vpack.c.b16 %v2795, %v2791
    %v2980 = vpack.c.b16 %v2800, %v2796
    %v2981 = vpack.c.b16 %v2801, %v2797
    %v2982 = vpack.c.b16 %v2802, %v2798
    %v2983 = vpack.c.b16 %v2803, %v2799
    %v2984 = vpack.c.b16 %v2808, %v2804
    %v2985 = vpack.c.b16 %v2809, %v2805
    %v2986 = vpack.c.b16 %v2810, %v2806
    %v2987 = vpack.c.b16 %v2811, %v2807
    %v2988 = vpack.c.b16 %v2816, %v2812
    %v2989 = vpack.c.b16 %v2817, %v2813
    %v2990 = vpack.c.b16 %v2818, %v2814
    %v2991 = vpack.c.b16 %v2819, %v2815
    %v2992 = vpack.c.b16 %v2824, %v2820
    %v2993 = vpack.c.b16 %v2825, %v2821
    %v2994 = vpack.c.b16 %v2826, %v2822
    %v2995 = vpack.c.b16 %v2827, %v2823
    %v2996 = vpack.c.b16 %v2832, %v2828
    %v2997 = vpack.c.b16 %v2833, %v2829
    %v2998 = vpack.c.b16 %v2834, %v2830
    %v2999 = vpack.c.b16 %v2835, %v2831
    %v3000 = vpack.c.b16 %v2840, %v2836
    %v3001 = vpack.c.b16 %v2841, %v2837
    %v3002 = vpack.c.b16 %v2842, %v2838
    %v3003 = vpack.c.b16 %v2843, %v2839
    %v3004 = vpack.c.b16 %v2848, %v2844
    %v3005 = vpack.c.b16 %v2849, %v2845
    %v3006 = vpack.c.b16 %v2850, %v2846
    %v3007 = vpack.c.b16 %v2851, %v2847
    %v3008 = vpack.c.b16 %v2856, %v2852
    %v3009 = vpack.c.b16 %v2857, %v2853
    %v3010 = vpack.c.b16 %v2858, %v2854
    %v3011 = vpack.c.b16 %v2859, %v2855
    %v3012 = vpack.c.b16 %v2864, %v2860
    %v3013 = vpack.c.b16 %v2865, %v2861
    %v3014 = vpack.c.b16 %v2866, %v2862
    %v3015 = vpack.c.b16 %v2867, %v2863
    %v3016 = vpack.c.b16 %v2872, %v2868
    %v3017 = vpack.c.b16 %v2873, %v2869
    %v3018 = vpack.c.b16 %v2874, %v2870
    %v3019 = vpack.c.b16 %v2875, %v2871
    %v3020 = vpack.c.b16 %v2880, %v2876
    %v3021 = vpack.c.b16 %v2881, %v2877
    %v3022 = vpack.c.b16 %v2882, %v2878
    %v3023 = vpack.c.b16 %v2883, %v2879
    %v3024 = vpack.c.b16 %v2888, %v2884
    %v3025 = vpack.c.b16 %v2889, %v2885
    %v3026 = vpack.c.b16 %v2890, %v2886
    %v3027 = vpack.c.b16 %v2891, %v2887
    %v3028 = vpack.c.b16 %v2896, %v2892
    %v3029 = vpack.c.b16 %v2897, %v2893
    %v3030 = vpack.c.b16 %v2898, %v2894
    %v3031 = vpack.c.b16 %v2899, %v2895
    %v3032 = vpack.c.b16 %v2904, %v2900
    %v3033 = vpack.c.b16 %v2905, %v2901
    %v3034 = vpack.c.b16 %v2906, %v2902
    %v3035 = vpack.c.b16 %v2907, %v2903
    %3164 = vmatprep.subr.bf16.mxu0 %v2909
    %3165 = vmatpush1.bf16.msra.mxu0 %v2908
    %3166 = vmatprep.subr.bf16.mxu0 %v2913
    %3167 = vmatpush1.bf16.msra.mxu0 %v2912
    %3168 = vmatprep.subr.bf16.mxu0 %v2917
    %3169 = vmatpush1.bf16.msra.mxu0 %v2916
    %3170 = vmatprep.subr.bf16.mxu0 %v2921
    %3171 = vmatpush1.bf16.msra.mxu0 %v2920
    %3172 = vmatprep.subr.bf16.mxu0 %v2925
    %3173 = vmatpush1.bf16.msra.mxu0 %v2924
    %3174 = vmatprep.subr.bf16.mxu0 %v2929
    %3175 = vmatpush1.bf16.msra.mxu0 %v2928
    %3176 = vmatprep.subr.bf16.mxu0 %v2933
    %3177 = vmatpush1.bf16.msra.mxu0 %v2932
    %3178 = vmatprep.subr.bf16.mxu0 %v2937
    %3179 = vmatpush1.bf16.msra.mxu0 %v2936
    %3180 = vmatprep.subr.bf16.mxu0 %v2941
    %3181 = vmatpush1.bf16.msra.mxu0 %v2940
    %3182 = vmatprep.subr.bf16.mxu0 %v2945
    %3183 = vmatpush1.bf16.msra.mxu0 %v2944
    %3184 = vmatprep.subr.bf16.mxu0 %v2949
    %3185 = vmatpush1.bf16.msra.mxu0 %v2948
    %3186 = vmatprep.subr.bf16.mxu0 %v2953
    %3187 = vmatpush1.bf16.msra.mxu0 %v2952
    %3188 = vmatprep.subr.bf16.mxu0 %v2957
    %3189 = vmatpush1.bf16.msra.mxu0 %v2956
    %3190 = vmatprep.subr.bf16.mxu0 %v2961
    %3191 = vmatpush1.bf16.msra.mxu0 %v2960
    %3192 = vmatprep.subr.bf16.mxu0 %v2965
    %3193 = vmatpush1.bf16.msra.mxu0 %v2964
    %3194 = vmatprep.subr.bf16.mxu0 %v2969
    %3195 = vmatpush1.bf16.msra.mxu0 %v2968
    %3196 = vmatprep.mubr.bf16.mxu0 %v2393
    %3197 = vmatmul.mubr.bf16.gmra.mrb[0].mxu0 %v2392
    %v3198 = vpop.f32.mrb[0].mxu0
    %v3199 = vadd.f32 0.0, %v3198
    %v3200 = vpop.f32.mrb[0].mxu0
    %v3201 = vadd.f32 0.0, %v3200
    %v3202 = vpop.f32.mrb[0].mxu0
    %v3203 = vpop.f32.mrb[0].mxu0
    %3204 = vdwg.mxu0
    %3205 = vmatprep.subr.bf16.mxu0 %v2973
    %3206 = vmatpush1.bf16.msra.mxu0 %v2972
    %3207 = vmatprep.subr.bf16.mxu0 %v2977
    %3208 = vmatpush1.bf16.msra.mxu0 %v2976
    %3209 = vmatprep.subr.bf16.mxu0 %v2981
    %3210 = vmatpush1.bf16.msra.mxu0 %v2980
    %3211 = vmatprep.subr.bf16.mxu0 %v2985
    %3212 = vmatpush1.bf16.msra.mxu0 %v2984
    %3213 = vmatprep.subr.bf16.mxu0 %v2989
    %3214 = vmatpush1.bf16.msra.mxu0 %v2988
    %3215 = vmatprep.subr.bf16.mxu0 %v2993
    %3216 = vmatpush1.bf16.msra.mxu0 %v2992
    %3217 = vmatprep.subr.bf16.mxu0 %v2997
    %3218 = vmatpush1.bf16.msra.mxu0 %v2996
    %3219 = vmatprep.subr.bf16.mxu0 %v3001
    %3220 = vmatpush1.bf16.msra.mxu0 %v3000
    %3221 = vmatprep.subr.bf16.mxu0 %v3005
    %3222 = vmatpush1.bf16.msra.mxu0 %v3004
    %3223 = vmatprep.subr.bf16.mxu0 %v3009
    %3224 = vmatpush1.bf16.msra.mxu0 %v3008
    %3225 = vmatprep.subr.bf16.mxu0 %v3013
    %3226 = vmatpush1.bf16.msra.mxu0 %v3012
    %3227 = vmatprep.subr.bf16.mxu0 %v3017
    %3228 = vmatpush1.bf16.msra.mxu0 %v3016
    %3229 = vmatprep.subr.bf16.mxu0 %v3021
    %3230 = vmatpush1.bf16.msra.mxu0 %v3020
    %3231 = vmatprep.subr.bf16.mxu0 %v3025
    %3232 = vmatpush1.bf16.msra.mxu0 %v3024
    %3233 = vmatprep.subr.bf16.mxu0 %v3029
    %3234 = vmatpush1.bf16.msra.mxu0 %v3028
    %3235 = vmatprep.subr.bf16.mxu0 %v3033
    %3236 = vmatpush1.bf16.msra.mxu0 %v3032
    %3237 = vmatprep.mubr.bf16.mxu0 %v2395
    %3238 = vmatmul.mubr.bf16.gmra.mrb[0].mxu0 %v2394
    %v3239 = vpop.f32.mrb[0].mxu0
    %v3240 = vadd.f32 %v3199, %v3239
    %v3241 = vpop.f32.mrb[0].mxu0
    %v3242 = vadd.f32 %v3201, %v3241
    %v3243 = vpop.f32.mrb[0].mxu0
    %v3244 = vpop.f32.mrb[0].mxu0
    %3245 = vdwg.mxu0
    %3246 = vmatprep.subr.bf16.mxu0 %v2911
    %3247 = vmatpush1.bf16.msra.mxu0 %v2910
    %3248 = vmatprep.subr.bf16.mxu0 %v2915
    %3249 = vmatpush1.bf16.msra.mxu0 %v2914
    %3250 = vmatprep.subr.bf16.mxu0 %v2919
    %3251 = vmatpush1.bf16.msra.mxu0 %v2918
    %3252 = vmatprep.subr.bf16.mxu0 %v2923
    %3253 = vmatpush1.bf16.msra.mxu0 %v2922
    %3254 = vmatprep.subr.bf16.mxu0 %v2927
    %3255 = vmatpush1.bf16.msra.mxu0 %v2926
    %3256 = vmatprep.subr.bf16.mxu0 %v2931
    %3257 = vmatpush1.bf16.msra.mxu0 %v2930
    %3258 = vmatprep.subr.bf16.mxu0 %v2935
    %3259 = vmatpush1.bf16.msra.mxu0 %v2934
    %3260 = vmatprep.subr.bf16.mxu0 %v2939
    %3261 = vmatpush1.bf16.msra.mxu0 %v2938
    %3262 = vmatprep.subr.bf16.mxu0 %v2943
    %3263 = vmatpush1.bf16.msra.mxu0 %v2942
    %3264 = vmatprep.subr.bf16.mxu0 %v2947
    %3265 = vmatpush1.bf16.msra.mxu0 %v2946
    %3266 = vmatprep.subr.bf16.mxu0 %v2951
    %3267 = vmatpush1.bf16.msra.mxu0 %v2950
    %3268 = vmatprep.subr.bf16.mxu0 %v2955
    %3269 = vmatpush1.bf16.msra.mxu0 %v2954
    %3270 = vmatprep.subr.bf16.mxu0 %v2959
    %3271 = vmatpush1.bf16.msra.mxu0 %v2958
    %3272 = vmatprep.subr.bf16.mxu0 %v2963
    %3273 = vmatpush1.bf16.msra.mxu0 %v2962
    %3274 = vmatprep.subr.bf16.mxu0 %v2967
    %3275 = vmatpush1.bf16.msra.mxu0 %v2966
    %3276 = vmatprep.subr.bf16.mxu0 %v2971
    %3277 = vmatpush1.bf16.msra.mxu0 %v2970
    %3278 = vmatprep.mubr.bf16.mxu0 %v2393
    %3279 = vmatmul.mubr.bf16.gmra.mrb[0].mxu0 %v2392
    %v3280 = vpop.f32.mrb[0].mxu0
    %v3281 = vadd.f32 0.0, %v3280
    %v3282 = vpop.f32.mrb[0].mxu0
    %v3283 = vadd.f32 0.0, %v3282
    %v3284 = vpop.f32.mrb[0].mxu0
    %v3285 = vpop.f32.mrb[0].mxu0
    %3286 = vdwg.mxu0
    %3287 = vmatprep.subr.bf16.mxu0 %v2975
    %3288 = vmatpush1.bf16.msra.mxu0 %v2974
    %3289 = vmatprep.subr.bf16.mxu0 %v2979
    %3290 = vmatpush1.bf16.msra.mxu0 %v2978
    %3291 = vmatprep.subr.bf16.mxu0 %v2983
    %3292 = vmatpush1.bf16.msra.mxu0 %v2982
    %3293 = vmatprep.subr.bf16.mxu0 %v2987
    %3294 = vmatpush1.bf16.msra.mxu0 %v2986
    %3295 = vmatprep.subr.bf16.mxu0 %v2991
    %3296 = vmatpush1.bf16.msra.mxu0 %v2990
    %3297 = vmatprep.subr.bf16.mxu0 %v2995
    %3298 = vmatpush1.bf16.msra.mxu0 %v2994
    %3299 = vmatprep.subr.bf16.mxu0 %v2999
    %3300 = vmatpush1.bf16.msra.mxu0 %v2998
    %3301 = vmatprep.subr.bf16.mxu0 %v3003
    %3302 = vmatpush1.bf16.msra.mxu0 %v3002
    %3303 = vmatprep.subr.bf16.mxu0 %v3007
    %3304 = vmatpush1.bf16.msra.mxu0 %v3006
    %3305 = vmatprep.subr.bf16.mxu0 %v3011
    %3306 = vmatpush1.bf16.msra.mxu0 %v3010
    %3307 = vmatprep.subr.bf16.mxu0 %v3015
    %3308 = vmatpush1.bf16.msra.mxu0 %v3014
    %3309 = vmatprep.subr.bf16.mxu0 %v3019
    %3310 = vmatpush1.bf16.msra.mxu0 %v3018
    %3311 = vmatprep.subr.bf16.mxu0 %v3023
    %3312 = vmatpush1.bf16.msra.mxu0 %v3022
    %3313 = vmatprep.subr.bf16.mxu0 %v3027
    %3314 = vmatpush1.bf16.msra.mxu0 %v3026
    %3315 = vmatprep.subr.bf16.mxu0 %v3031
    %3316 = vmatpush1.bf16.msra.mxu0 %v3030
    %3317 = vmatprep.subr.bf16.mxu0 %v3035
    %3318 = vmatpush1.bf16.msra.mxu0 %v3034
    %3319 = vmatprep.mubr.bf16.mxu0 %v2395
    %3320 = vmatmul.mubr.bf16.gmra.mrb[0].mxu0 %v2394
    %v3321 = vpop.f32.mrb[0].mxu0
    %v3322 = vadd.f32 %v3281, %v3321
    %v3323 = vpop.f32.mrb[0].mxu0
    %v3324 = vadd.f32 %v3283, %v3323
    %v3325 = vpop.f32.mrb[0].mxu0
    %v3326 = vpop.f32.mrb[0].mxu0
    %3327 = vdwg.mxu0
    %3328 = vst [vmem:[#allocation10] sm:$0xff] %v3240
    %3329 = vst [vmem:[#allocation10 + $0x8] sm:$0xff] %v3242
    %3330 = vst [vmem:[#allocation10 + $0x10] sm:$0xff] %v3322
    %3331 = vst [vmem:[#allocation10 + $0x18] sm:$0xff] %v3324
    // Predicated region
    $region38: #{tpu_custom_call.1} parent=1 // pred_check
      _
    $region39: #{tpu_custom_call.1} parent=1 // pred_check_branch
      %3333 = sbr.rel (0) target = $region41
    $region40: #{tpu_custom_call.1} parent=1 // pred_region
      %s3335 = ssub.s32 512, 512
      %3336 = vsyncadd [#allocation4], %s3335
      %s3338 = sshll.u32 [#allocation10], 4
      %s3339 = int_to_ptr.vmem [resolvable:$true] %s3338
      %3341 = dma.vmem_to_hbm [thread:$0]  %s3339, 512, %s5, [#allocation4]
    $region41: #{tpu_custom_call.1} parent=1 // pred_fallthru
      _
    // Predicated region
    $region42: #{tpu_custom_call.1} parent=1 // pred_check
      _
    $region43: #{tpu_custom_call.1} parent=1 // pred_check_branch
      %3343 = sbr.rel (0) target = $region45
    $region44: #{tpu_custom_call.1} parent=1 // pred_region
      %3344 = dma.done [#allocation4], 512
    $region45: #{tpu_custom_call.1} parent=1 // pred_fallthru
      _
    %3345 = vsyncpa [#allocation3], 1
    %3346 = vsyncpa [#allocation6], 1
    %3347 = vsyncpa [#allocation9], 1
    %3348 = vsyncpa [#allocation4], 1

</llo_original>
